<compile_context>
chip_gen: v5e
topology: v5e:2x2
jax: 0.10.0
libtpu: 0.0.40
codegen_flags: <defaults>
</compile_context>

<pallas_src>
import jax
import jax.numpy as jnp
from jax import lax
from jax.experimental import pallas as pl
from jax.experimental.pallas import tpu as pltpu


def bottleneck_kernel(x_ref, w1_ref, b1_ref, w2_ref, b2_ref, w3_ref, b3_ref,
                      out_ref, pad_ref):
    # x_ref block: (Bt, H, W, Cin); weights are whole (grid-invariant) in VMEM.
    Bt, H, W, cin = x_ref.shape
    planes = w1_ref.shape[1]
    cout = w3_ref.shape[1]
    Wp = pad_ref.shape[2]          # padded row pitch (>= W + 1, multiple of 16)
    Lp = Bt * H * Wp               # flattened spatial length at padded pitch
    M = Bt * H * W                 # valid output rows this grid step

    # ---- conv1: 1x1 conv == channel matmul (bf16 x bf16 -> f32) + bias + ReLU.
    xb = x_ref[...].astype(jnp.bfloat16).reshape(M, cin)
    y1 = jnp.dot(xb, w1_ref[...], preferred_element_type=jnp.float32)
    y1 = jnp.maximum(y1 + b1_ref[...], 0.0)                      # (M, planes)

    # ---- conv2: 3x3, pad=1, via bf16 padded-pitch scratch + fused-dx matmul.
    # Layout: columns [0..W-1] = data, [W..Wp-1] = zeros; rows 0 and H+1 = zeros.
    # Borders are re-zeroed every step (multi-core safety, see header note);
    # all stores are sublane-pair aligned for even W.
    zdt = pad_ref.dtype
    pad_ref[:, 0:1, :, :] = jnp.zeros((Bt, 1, Wp, planes), zdt)
    pad_ref[:, H + 1:H + 2, :, :] = jnp.zeros((Bt, 1, Wp, planes), zdt)
    pad_ref[:, :, W:Wp, :] = jnp.zeros((Bt, H + 2, Wp - W, planes), zdt)
    pad_ref[:, 1:H + 1, 0:W, :] = y1.astype(zdt).reshape(Bt, H, W, planes)

    # dy taps: 3 aligned leading-dim slices of the scratch, concatenated along K.
    cat = jnp.concatenate(
        [pad_ref[:, dy:dy + H, :, :] for dy in range(3)], axis=-1)  # (Bt,H,Wp,3p)
    cat = cat.reshape(Lp, 3 * planes)                               # bf16

    # Fused dx matmul: one (Lp, 3p) @ (3p, 3p) MXU pass; dx lives in the output
    # columns.  Shift each planes-wide group with pltpu.roll:
    #   dx=0 -> out[i] = z[i-1], dx=1 -> z[i], dx=2 -> out[i] = z[i+1].
    # Wrap-around / cross-row reads land in zero pad columns (column W and
    # column Wp-1), which is exactly the conv's left/right zero padding.
    z = jnp.dot(cat, w2_ref[...], preferred_element_type=jnp.float32)
    p = planes
    acc = z[:, p:2 * p]                                             # dx = 1
    acc = acc + pltpu.roll(z[:, 0:p], 1, axis=0)                    # dx = 0
    acc = acc + pltpu.roll(z[:, 2 * p:3 * p], Lp - 1, axis=0)       # dx = 2

    # Compact to the valid width before bias/ReLU/conv3 (drops the Wp-W junk
    # columns so the widest matmul runs over M rows, not Bt*H*Wp).
    accv = acc.reshape(Bt, H, Wp, planes)[:, :, :W, :].reshape(M, planes)
    y2 = jnp.maximum(accv + b2_ref[...], 0.0).astype(jnp.bfloat16)

    # ---- conv3: 1x1 expand + bias.
    y3 = jnp.dot(y2, w3_ref[...], preferred_element_type=jnp.float32)
    y3 = y3 + b3_ref[...]                                           # (M, cout)

    # ---- residual add (identity shortcut, re-read from the VMEM ref) + ReLU.
    res = x_ref[...].astype(jnp.float32).reshape(M, cout)
    out = jnp.maximum(y3 + res, 0.0)
    out_ref[...] = out.reshape(Bt, H, W, cout).astype(out_ref.dtype)


def _pick_batch_tile(n, h, w, target_rows=256):
    """Smallest divisor of n whose tile reaches target_rows of matmul M."""
    for bt in range(1, n + 1):
        if n % bt == 0 and bt * h * w >= target_rows:
            return bt
    return n


def bottleneck_pallas_nhwc(x_nhwc, params, batch_tile=None):
    """Fused Bottleneck forward, NHWC in / NHWC out (no layout transposes)."""
    w1, b1, w2, b2, w3, b3 = params
    N, H, W, C = x_nhwc.shape
    planes = w1.shape[1]
    cout = w3.shape[1]
    assert C == cout, "identity block requires inplanes == planes * expansion"

    Bt = batch_tile if batch_tile is not None else _pick_batch_tile(N, H, W)
    assert N % Bt == 0

    # Padded row pitch: multiple of 16 sublanes (bf16 scratch packing).
    # The roll-based left/right padding needs at least one zero column past the
    # data (column W) and a zero column at Wp-1 -> Wp >= W + 1.
    Wp = ((W + 2 + 15) // 16) * 16
    assert Wp >= W + 1, "pad pitch too small for roll-based conv padding"

    def full(a):
        # TODO(synk): pipeline_mode=pl.Buffered(1) for grid-invariant weights.
        return pl.BlockSpec(a.shape, lambda n, nd=a.ndim: (0,) * nd)

    return pl.pallas_call(
        bottleneck_kernel,
        out_shape=jax.ShapeDtypeStruct((N, H, W, cout), x_nhwc.dtype),
        grid_spec=pltpu.PrefetchScalarGridSpec(
            num_scalar_prefetch=0,
            grid=(N // Bt,),
            in_specs=[
                pl.BlockSpec((Bt, H, W, C), lambda n: (n, 0, 0, 0)),
                full(w1), full(b1), full(w2), full(b2), full(w3), full(b3),
            ],
            out_specs=pl.BlockSpec((Bt, H, W, cout), lambda n: (n, 0, 0, 0)),
            scratch_shapes=[pltpu.VMEM((Bt, H + 2, Wp, planes), jnp.bfloat16)],
        ),
        compiler_params=pltpu.CompilerParams(
            dimension_semantics=("parallel",)),
    )(x_nhwc, w1, b1, w2, b2, w3, b3)


def bottleneck_pallas_nchw(x_nchw, params):
    # Thin PyTorch-layout adapter. In a full NHWC network, call
    # bottleneck_pallas_nhwc directly and skip these transposes entirely.
    x = jnp.transpose(x_nchw, (0, 2, 3, 1))
    return jnp.transpose(bottleneck_pallas_nhwc(x, params), (0, 3, 1, 2))


def make_params(key, inplanes, planes, eps=1e-5):
    """Deterministic synthetic parameters (PyTorch shapes), BN folded."""
    exp = 4
    ks = jax.random.split(key, 6)
    # PyTorch conv weights: (out_ch, in_ch, kh, kw), bias=False
    w1_t = jax.random.normal(ks[0], (planes, inplanes, 1, 1), jnp.float32) * 0.1
    w2_t = jax.random.normal(ks[1], (planes, planes, 3, 3), jnp.float32) * 0.1
    w3_t = jax.random.normal(ks[2], (planes * exp, planes, 1, 1), jnp.float32) * 0.1

    def bn_fold(k, c):
        k1, k2, k3, k4 = jax.random.split(k, 4)
        gamma = jax.random.uniform(k1, (c,), minval=0.5, maxval=1.5)
        beta = jax.random.normal(k2, (c,)) * 0.1
        mean = jax.random.normal(k3, (c,)) * 0.1
        var = jax.random.uniform(k4, (c,), minval=0.5, maxval=1.5)
        scale = gamma / jnp.sqrt(var + eps)
        bias = beta - mean * scale
        return scale.astype(jnp.float32), bias.astype(jnp.float32)

    s1, b1 = bn_fold(ks[3], planes)
    s2, b2 = bn_fold(ks[4], planes)
    s3, b3 = bn_fold(ks[5], planes * exp)
    torch_params = (w1_t, w2_t, w3_t, s1, b1, s2, b2, s3, b3)

    # Kernel packing: channels-last matmul layouts, BN scales folded into the
    # weight output columns, bf16 matmul operands (f32 accumulation in-kernel).
    w1 = (jnp.transpose(w1_t[:, :, 0, 0], (1, 0)) * s1[None, :]).astype(jnp.bfloat16)
    w3 = (jnp.transpose(w3_t[:, :, 0, 0], (1, 0)) * s3[None, :]).astype(jnp.bfloat16)
    # conv2: OIHW -> (kh, kw, ci, co), scale-folded, packed as ONE fused
    # (3*planes, 3*planes) matrix: rows = (kh, ci), cols = (kw, co).
    w2k = jnp.transpose(w2_t, (2, 3, 1, 0)) * s2[None, None, None, :]
    w2 = (jnp.transpose(w2k, (0, 2, 1, 3))
          .reshape(3 * planes, 3 * planes).astype(jnp.bfloat16))
    kernel_params = (w1, b1.reshape(1, -1), w2, b2.reshape(1, -1),
                     w3, b3.reshape(1, -1))
    return torch_params, kernel_params


def reference(x_nchw, torch_params):
    """Pure-JAX f32 reference with lax convolutions (BN folded, eval mode)."""
    w1_t, w2_t, w3_t, s1, b1, s2, b2, s3, b3 = torch_params
    x = jnp.transpose(x_nchw, (0, 2, 3, 1))  # NHWC

    def conv(y, w_oihw, pad):
        w = jnp.transpose(w_oihw, (2, 3, 1, 0))  # OIHW -> HWIO
        return lax.conv_general_dilated(
            y, w, (1, 1), pad, dimension_numbers=('NHWC', 'HWIO', 'NHWC'))

    y = conv(x, w1_t, 'VALID')
    y = jnp.maximum(y * s1 + b1, 0.0)
    y = conv(y, w2_t, ((1, 1), (1, 1)))
    y = jnp.maximum(y * s2 + b2, 0.0)
    y = conv(y, w3_t, 'VALID')
    y = y * s3 + b3
    out = jnp.maximum(y + x, 0.0)
    return jnp.transpose(out, (0, 3, 1, 2))


if __name__ == "__main__":
    key = jax.random.PRNGKey(0)
    k_x, k_p = jax.random.split(key)

    # Small but lane-aligned shapes: Bottleneck(inplanes=128, planes=32);
    # identity block requires inplanes == planes * expansion (= 128).
    # N=16 -> batch tile Bt=4, grid of 4 steps, M = 4*8*8 = 256 matmul rows.
    N, inplanes, planes, H, W = 16, 128, 32, 8, 8
    x = jax.random.normal(k_x, (N, inplanes, H, W), jnp.float32)   # NCHW

    torch_params, kernel_params = make_params(k_p, inplanes, planes)

    # bf16 activation I/O (kernel is HBM-bound at realistic ResNet shapes).
    out = bottleneck_pallas_nchw(x.astype(jnp.bfloat16), kernel_params)
    out = jax.block_until_ready(out)

    ref = reference(x, torch_params)
    assert out.shape == (N, inplanes, H, W)
    out_f32 = out.astype(jnp.float32)
    err = jnp.max(jnp.abs(out_f32 - ref))
    # bf16 matmul operands + bf16 activation I/O through three chained convs.
    assert jnp.allclose(out_f32, ref, atol=2e-1, rtol=2e-1), \
        f"max abs err {err}"

    print("KERNEL_OK")
</pallas_src>

<mosaic_0001>
module attributes {stable_mosaic.version = 11 : i64} {
  func.func @bottleneck_kernel(%arg0: i32, %arg1: memref<4x8x8x128xbf16, #tpu.memory_space<vmem>>, %arg2: memref<128x32xbf16, #tpu.memory_space<vmem>>, %arg3: memref<1x32xf32, #tpu.memory_space<vmem>>, %arg4: memref<96x96xbf16, #tpu.memory_space<vmem>>, %arg5: memref<1x32xf32, #tpu.memory_space<vmem>>, %arg6: memref<32x128xbf16, #tpu.memory_space<vmem>>, %arg7: memref<1x128xf32, #tpu.memory_space<vmem>>, %arg8: memref<4x8x8x128xbf16, #tpu.memory_space<vmem>>, %arg9: memref<4x10x16x32xbf16, #tpu.memory_space<vmem>>) attributes {dimension_semantics = [#tpu.dimension_semantics<parallel>], iteration_bounds = array<i64: 4>, scalar_prefetch = 0 : i64, scratch_operands = 1 : i64, tpu.core_type = #tpu.core_type<tc>, window_params = [{transform_indices = @transform_0, window_bounds = array<i64: 4, 8, 8, 128>}, {pipeline_mode = #tpu.pipeline_mode<synchronous>, transform_indices = @transform_1, window_bounds = array<i64: 128, 32>}, {pipeline_mode = #tpu.pipeline_mode<synchronous>, transform_indices = @transform_2, window_bounds = array<i64: 1, 32>}, {pipeline_mode = #tpu.pipeline_mode<synchronous>, transform_indices = @transform_3, window_bounds = array<i64: 96, 96>}, {pipeline_mode = #tpu.pipeline_mode<synchronous>, transform_indices = @transform_4, window_bounds = array<i64: 1, 32>}, {pipeline_mode = #tpu.pipeline_mode<synchronous>, transform_indices = @transform_5, window_bounds = array<i64: 32, 128>}, {pipeline_mode = #tpu.pipeline_mode<synchronous>, transform_indices = @transform_6, window_bounds = array<i64: 1, 128>}, {transform_indices = @transform_7, window_bounds = array<i64: 4, 8, 8, 128>}]} {
    %c0 = arith.constant 0 : index
    %c0_0 = arith.constant 0 : index
    %c0_1 = arith.constant 0 : index
    %c0_2 = arith.constant 0 : index
    %0 = vector.load %arg1[%c0, %c0_0, %c0_1, %c0_2] : memref<4x8x8x128xbf16, #tpu.memory_space<vmem>>, vector<4x8x8x128xbf16>
    %1 = vector.shape_cast %0 : vector<4x8x8x128xbf16> to vector<256x128xbf16>
    %c0_3 = arith.constant 0 : index
    %c0_4 = arith.constant 0 : index
    %2 = vector.load %arg2[%c0_3, %c0_4] : memref<128x32xbf16, #tpu.memory_space<vmem>>, vector<128x32xbf16>
    %cst = arith.constant dense<0.000000e+00> : vector<256x32xf32>
    %3 = tpu.matmul %1, %2, %cst {dimension_numbers = #tpu.dot_dimension_numbers<[1], [0], [0], [1], [0, 0, 1, 1], [], []>} : vector<256x128xbf16>, vector<128x32xbf16>, vector<256x32xf32> -> vector<256x32xf32>
    %c0_5 = arith.constant 0 : index
    %c0_6 = arith.constant 0 : index
    %4 = vector.load %arg3[%c0_5, %c0_6] : memref<1x32xf32, #tpu.memory_space<vmem>>, vector<1x32xf32>
    %5 = vector.broadcast %4 : vector<1x32xf32> to vector<256x32xf32>
    %6 = arith.addf %3, %5 : vector<256x32xf32>
    %cst_7 = arith.constant 0.000000e+00 : f32
    %7 = vector.broadcast %cst_7 : f32 to vector<256x32xf32>
    %8 = arith.maximumf %6, %7 : vector<256x32xf32>
    %cst_8 = arith.constant 0.000000e+00 : bf16
    %9 = vector.broadcast %cst_8 : bf16 to vector<4x1x16x32xbf16>
    %c0_9 = arith.constant 0 : index
    %c0_10 = arith.constant 0 : index
    %c0_11 = arith.constant 0 : index
    %c0_12 = arith.constant 0 : index
    %10 = vector.load %arg9[%c0_9, %c0_10, %c0_11, %c0_12] : memref<4x10x16x32xbf16, #tpu.memory_space<vmem>>, vector<4x1x16x32xbf16>
    tpu.vector_store %arg9[%c0_9, %c0_10, %c0_11, %c0_12], %9 {strides = array<i32>} : memref<4x10x16x32xbf16, #tpu.memory_space<vmem>>, vector<4x1x16x32xbf16>,
    %cst_13 = arith.constant 0.000000e+00 : bf16
    %11 = vector.broadcast %cst_13 : bf16 to vector<4x1x16x32xbf16>
    %c0_14 = arith.constant 0 : index
    %c9 = arith.constant 9 : index
    %c0_15 = arith.constant 0 : index
    %c0_16 = arith.constant 0 : index
    %12 = vector.load %arg9[%c0_14, %c9, %c0_15, %c0_16] : memref<4x10x16x32xbf16, #tpu.memory_space<vmem>>, vector<4x1x16x32xbf16>
    tpu.vector_store %arg9[%c0_14, %c9, %c0_15, %c0_16], %11 {strides = array<i32>} : memref<4x10x16x32xbf16, #tpu.memory_space<vmem>>, vector<4x1x16x32xbf16>,
    %cst_17 = arith.constant 0.000000e+00 : bf16
    %13 = vector.broadcast %cst_17 : bf16 to vector<4x10x8x32xbf16>
    %c0_18 = arith.constant 0 : index
    %c0_19 = arith.constant 0 : index
    %c8 = arith.constant 8 : index
    %c0_20 = arith.constant 0 : index
    %14 = vector.load %arg9[%c0_18, %c0_19, %c8, %c0_20] : memref<4x10x16x32xbf16, #tpu.memory_space<vmem>>, vector<4x10x8x32xbf16>
    tpu.vector_store %arg9[%c0_18, %c0_19, %c8, %c0_20], %13 {strides = array<i32>} : memref<4x10x16x32xbf16, #tpu.memory_space<vmem>>, vector<4x10x8x32xbf16>,
    %15 = arith.truncf %8 : vector<256x32xf32> to vector<256x32xbf16>
    %16 = vector.shape_cast %15 : vector<256x32xbf16> to vector<4x8x8x32xbf16>
    %c0_21 = arith.constant 0 : index
    %c1 = arith.constant 1 : index
    %c0_22 = arith.constant 0 : index
    %c0_23 = arith.constant 0 : index
    %17 = vector.load %arg9[%c0_21, %c1, %c0_22, %c0_23] : memref<4x10x16x32xbf16, #tpu.memory_space<vmem>>, vector<4x8x8x32xbf16>
    tpu.vector_store %arg9[%c0_21, %c1, %c0_22, %c0_23], %16 {strides = array<i32>} : memref<4x10x16x32xbf16, #tpu.memory_space<vmem>>, vector<4x8x8x32xbf16>,
    %c0_24 = arith.constant 0 : index
    %c0_25 = arith.constant 0 : index
    %c0_26 = arith.constant 0 : index
    %c0_27 = arith.constant 0 : index
    %18 = vector.load %arg9[%c0_24, %c0_25, %c0_26, %c0_27] : memref<4x10x16x32xbf16, #tpu.memory_space<vmem>>, vector<4x8x16x32xbf16>
    %c0_28 = arith.constant 0 : index
    %c1_29 = arith.constant 1 : index
    %c0_30 = arith.constant 0 : index
    %c0_31 = arith.constant 0 : index
    %19 = vector.load %arg9[%c0_28, %c1_29, %c0_30, %c0_31] : memref<4x10x16x32xbf16, #tpu.memory_space<vmem>>, vector<4x8x16x32xbf16>
    %c0_32 = arith.constant 0 : index
    %c2 = arith.constant 2 : index
    %c0_33 = arith.constant 0 : index
    %c0_34 = arith.constant 0 : index
    %20 = vector.load %arg9[%c0_32, %c2, %c0_33, %c0_34] : memref<4x10x16x32xbf16, #tpu.memory_space<vmem>>, vector<4x8x16x32xbf16>
    %21 = tpu.concatenate %18, %19, %20 in 3 : vector<4x8x16x32xbf16>, vector<4x8x16x32xbf16>, vector<4x8x16x32xbf16> -> vector<4x8x16x96xbf16>
    %22 = vector.shape_cast %21 : vector<4x8x16x96xbf16> to vector<512x96xbf16>
    %c0_35 = arith.constant 0 : index
    %c0_36 = arith.constant 0 : index
    %23 = vector.load %arg4[%c0_35, %c0_36] : memref<96x96xbf16, #tpu.memory_space<vmem>>, vector<96x96xbf16>
    %cst_37 = arith.constant dense<0.000000e+00> : vector<512x96xf32>
    %24 = tpu.matmul %22, %23, %cst_37 {dimension_numbers = #tpu.dot_dimension_numbers<[1], [0], [0], [1], [0, 0, 1, 1], [], []>} : vector<512x96xbf16>, vector<96x96xbf16>, vector<512x96xf32> -> vector<512x96xf32>
    %25 = vector.extract_strided_slice %24 {offsets = [0, 32], sizes = [512, 32], strides = [1, 1]} : vector<512x96xf32> to vector<512x32xf32>
    %26 = vector.extract_strided_slice %24 {offsets = [0, 0], sizes = [512, 32], strides = [1, 1]} : vector<512x96xf32> to vector<512x32xf32>
    %c1_i32 = arith.constant 1 : i32
    %27 = tpu.dynamic_rotate %26 by %c1_i32 dim 0 : vector<512x32xf32>, i32 -> vector<512x32xf32>
    %28 = arith.addf %25, %27 : vector<512x32xf32>
    %29 = vector.extract_strided_slice %24 {offsets = [0, 64], sizes = [512, 32], strides = [1, 1]} : vector<512x96xf32> to vector<512x32xf32>
    %c511_i32 = arith.constant 511 : i32
    %30 = tpu.dynamic_rotate %29 by %c511_i32 dim 0 : vector<512x32xf32>, i32 -> vector<512x32xf32>
    %31 = arith.addf %28, %30 : vector<512x32xf32>
    %32 = vector.shape_cast %31 : vector<512x32xf32> to vector<4x8x16x32xf32>
    %33 = vector.extract_strided_slice %32 {offsets = [0, 0, 0, 0], sizes = [4, 8, 8, 32], strides = [1, 1, 1, 1]} : vector<4x8x16x32xf32> to vector<4x8x8x32xf32>
    %34 = vector.shape_cast %33 : vector<4x8x8x32xf32> to vector<256x32xf32>
    %c0_38 = arith.constant 0 : index
    %c0_39 = arith.constant 0 : index
    %35 = vector.load %arg5[%c0_38, %c0_39] : memref<1x32xf32, #tpu.memory_space<vmem>>, vector<1x32xf32>
    %36 = vector.broadcast %35 : vector<1x32xf32> to vector<256x32xf32>
    %37 = arith.addf %34, %36 : vector<256x32xf32>
    %cst_40 = arith.constant 0.000000e+00 : f32
    %38 = vector.broadcast %cst_40 : f32 to vector<256x32xf32>
    %39 = arith.maximumf %37, %38 : vector<256x32xf32>
    %40 = arith.truncf %39 : vector<256x32xf32> to vector<256x32xbf16>
    %c0_41 = arith.constant 0 : index
    %c0_42 = arith.constant 0 : index
    %41 = vector.load %arg6[%c0_41, %c0_42] : memref<32x128xbf16, #tpu.memory_space<vmem>>, vector<32x128xbf16>
    %cst_43 = arith.constant dense<0.000000e+00> : vector<256x128xf32>
    %42 = tpu.matmul %40, %41, %cst_43 {dimension_numbers = #tpu.dot_dimension_numbers<[1], [0], [0], [1], [0, 0, 1, 1], [], []>} : vector<256x32xbf16>, vector<32x128xbf16>, vector<256x128xf32> -> vector<256x128xf32>
    %c0_44 = arith.constant 0 : index
    %c0_45 = arith.constant 0 : index
    %43 = vector.load %arg7[%c0_44, %c0_45] : memref<1x128xf32, #tpu.memory_space<vmem>>, vector<1x128xf32>
    %44 = vector.broadcast %43 : vector<1x128xf32> to vector<256x128xf32>
    %45 = arith.addf %42, %44 : vector<256x128xf32>
    %c0_46 = arith.constant 0 : index
    %c0_47 = arith.constant 0 : index
    %c0_48 = arith.constant 0 : index
    %c0_49 = arith.constant 0 : index
    %46 = vector.load %arg1[%c0_46, %c0_47, %c0_48, %c0_49] : memref<4x8x8x128xbf16, #tpu.memory_space<vmem>>, vector<4x8x8x128xbf16>
    %47 = arith.extf %46 : vector<4x8x8x128xbf16> to vector<4x8x8x128xf32>
    %48 = vector.shape_cast %47 : vector<4x8x8x128xf32> to vector<256x128xf32>
    %49 = arith.addf %45, %48 : vector<256x128xf32>
    %cst_50 = arith.constant 0.000000e+00 : f32
    %50 = vector.broadcast %cst_50 : f32 to vector<256x128xf32>
    %51 = arith.maximumf %49, %50 : vector<256x128xf32>
    %52 = vector.shape_cast %51 : vector<256x128xf32> to vector<4x8x8x128xf32>
    %53 = arith.truncf %52 : vector<4x8x8x128xf32> to vector<4x8x8x128xbf16>
    %c0_51 = arith.constant 0 : index
    %c0_52 = arith.constant 0 : index
    %c0_53 = arith.constant 0 : index
    %c0_54 = arith.constant 0 : index
    %54 = vector.load %arg8[%c0_51, %c0_52, %c0_53, %c0_54] : memref<4x8x8x128xbf16, #tpu.memory_space<vmem>>, vector<4x8x8x128xbf16>
    tpu.vector_store %arg8[%c0_51, %c0_52, %c0_53, %c0_54], %53 {strides = array<i32>} : memref<4x8x8x128xbf16, #tpu.memory_space<vmem>>, vector<4x8x8x128xbf16>,
    return
  }
  func.func @transform_0(%arg0: i32) -> (i32, i32, i32, i32) {
    %c0_i32 = arith.constant 0 : i32
    %c0_i32_0 = arith.constant 0 : i32
    %c0_i32_1 = arith.constant 0 : i32
    %c0_i32_2 = arith.constant 0 : i32
    return %arg0, %c0_i32, %c0_i32_0, %c0_i32_1 : i32, i32, i32, i32
  }
  func.func @transform_1(%arg0: i32) -> (i32, i32) {
    %c0_i32 = arith.constant 0 : i32
    %c0_i32_0 = arith.constant 0 : i32
    %c0_i32_1 = arith.constant 0 : i32
    return %c0_i32, %c0_i32_0 : i32, i32
  }
  func.func @transform_2(%arg0: i32) -> (i32, i32) {
    %c0_i32 = arith.constant 0 : i32
    %c0_i32_0 = arith.constant 0 : i32
    %c0_i32_1 = arith.constant 0 : i32
    return %c0_i32, %c0_i32_0 : i32, i32
  }
  func.func @transform_3(%arg0: i32) -> (i32, i32) {
    %c0_i32 = arith.constant 0 : i32
    %c0_i32_0 = arith.constant 0 : i32
    %c0_i32_1 = arith.constant 0 : i32
    return %c0_i32, %c0_i32_0 : i32, i32
  }
  func.func @transform_4(%arg0: i32) -> (i32, i32) {
    %c0_i32 = arith.constant 0 : i32
    %c0_i32_0 = arith.constant 0 : i32
    %c0_i32_1 = arith.constant 0 : i32
    return %c0_i32, %c0_i32_0 : i32, i32
  }
  func.func @transform_5(%arg0: i32) -> (i32, i32) {
    %c0_i32 = arith.constant 0 : i32
    %c0_i32_0 = arith.constant 0 : i32
    %c0_i32_1 = arith.constant 0 : i32
    return %c0_i32, %c0_i32_0 : i32, i32
  }
  func.func @transform_6(%arg0: i32) -> (i32, i32) {
    %c0_i32 = arith.constant 0 : i32
    %c0_i32_0 = arith.constant 0 : i32
    %c0_i32_1 = arith.constant 0 : i32
    return %c0_i32, %c0_i32_0 : i32, i32
  }
  func.func @transform_7(%arg0: i32) -> (i32, i32, i32, i32) {
    %c0_i32 = arith.constant 0 : i32
    %c0_i32_0 = arith.constant 0 : i32
    %c0_i32_1 = arith.constant 0 : i32
    %c0_i32_2 = arith.constant 0 : i32
    return %arg0, %c0_i32, %c0_i32_0, %c0_i32_1 : i32, i32, i32, i32
  }
}

</mosaic_0001>

<llo_original>
// kernel: tpu_custom_call.1
$region0: #{tpu_custom_call.1}
  #allocation0 [shape = 'u32[]', space=smem, size = 0x4, offset = 0x4, fixed_abs, tag = 'smem constant byte address 0x4 - core index']
  #allocation1 [shape = 'u32[72,128]{1,0:T(1,128)}', space=vmem, size = 0x9000, scoped, tag = 'internal scratch']
  #allocation2 [shape = 'bf16[4,10,16,32]{3,2,1,0:T(8,128)(2,1)}', space=vmem, size = 0x28000, scoped, tag = 'scratch operand']
  %s0 = inlined_call_operand.hbm [shape: bf16[16,8,8,128], index: 0, kind: input, shape index: {}]
  %s1 = inlined_call_operand.vmem [shape: bf16[128,32], index: 1, kind: input, shape index: {}]
  %s2 = inlined_call_operand.vmem [shape: f32[1,32], index: 2, kind: input, shape index: {}]
  %s3 = inlined_call_operand.vmem [shape: bf16[96,96], index: 3, kind: input, shape index: {}]
  %s4 = inlined_call_operand.vmem [shape: f32[1,32], index: 4, kind: input, shape index: {}]
  %s5 = inlined_call_operand.vmem [shape: bf16[32,128], index: 5, kind: input, shape index: {}]
  %s6 = inlined_call_operand.vmem [shape: f32[1,128], index: 6, kind: input, shape index: {}]
  %s7 = inlined_call_operand.hbm [shape: bf16[16,8,8,128], index: 7, kind: output, shape index: {}]
  %s8 = sld [smem:[#allocation0]]
  $region65: #{tpu_custom_call.1} parent=0
    _
  %s10 = ssub.s32 1, %s8
  %s11 = scalar_select 0, %s10, %s8
  $region1: #{tpu_custom_call.1} parent=0
    #allocation3 [shape = 'u8[131072]{0}', space=vmem, size = 0x20000, scoped, tag = 'input window, operand 0']
    #allocation4 [shape = 's32[2]{0}', space=sflag, size = 0x8, scoped, tag = 'scoped memory for tpu_custom_call.1']
    #allocation5 [shape = 's32[2]{0}', space=sflag, size = 0x8, scoped, tag = 'scoped memory for tpu_custom_call.1']
    #allocation6 [shape = 'u8[131072]{0}', space=vmem, size = 0x20000, scoped, tag = 'output window, operand 0']
    %12 = vsyncpa [#allocation4], 0
    %s13 = scalar_lea.sflag [#allocation4], 1
    %14 = vsyncpa %s13, 0
    %15 = vsyncpa [#allocation5], 0
    %s16 = scalar_lea.sflag [#allocation5], 1
    %17 = vsyncpa %s16, 0
    loop: start=0, step=1, limit=6
    $region2: #{tpu_custom_call.1} parent=1 // loop_pre_header
      _
    $region3: #{tpu_custom_call.1} parent=1 // loop_header
      %s19 = sphi 0, %s23
      %p20 = scmp.ge.s32.totalorder %s19, 6
      %s29 = sphi 0, %s31
      %s32 = sphi 0, %s29
      %s33 = sphi 0, %s32
      %s49 = sphi 0, %s33
      %s53 = sphi 0, %s53
      %s55 = sphi 0, %s53
      %s56 = sphi 0, %s55
      %s70 = sphi 0, %s56
      %s74 = sphi 0, %s74
      %s76 = sphi 0, %s74
      %s77 = sphi 0, %s76
      %s91 = sphi 0, %s77
      %s95 = sphi 0, %s95
      %s97 = sphi 0, %s95
      %s98 = sphi 0, %s97
      %s112 = sphi 0, %s98
      %s116 = sphi 0, %s116
      %s118 = sphi 0, %s116
      %s119 = sphi 0, %s118
      %s133 = sphi 0, %s119
      %s137 = sphi 0, %s137
      %s139 = sphi 0, %s137
      %s140 = sphi 0, %s139
      %s154 = sphi 0, %s140
      %s158 = sphi 0, %s158
      %s160 = sphi 0, %s158
      %s161 = sphi 0, %s160
      %s175 = sphi 0, %s161
      %s181 = sphi 0, %s183
      %s184 = sphi 0, %s181
      %s185 = sphi 0, %s184
      %s201 = sphi 0, %s185
    $region4: #{tpu_custom_call.1} parent=1 // loop_header_branch
      %22 = sbr.rel (%p20) target = $region8
    $region5: #{tpu_custom_call.1} parent=1 // loop_body
      %s24 = ssub.s32 %s19, 1
      %s25 = ssub.s32 %s19, 2
      %s26 = sadd.s32 %s19, 1
      %s27 = ssub.s32 %s19, %s26
      %p28 = scmp.eq.s32.totalorder %s27, 0
      %s30 = sadd.s32 %s29, 1
      %s31 = scalar_select %p28, %s29, %s30
      %p34 = pneg %p28
      %p35 = scmp.eq.s32.totalorder %s19, 3
      %p36 = por %p34, %p35
      %p37 = scmp.ne.s32.totalorder %s29, %s32
      %p38 = scmp.eq.s32.totalorder %s19, 0
      %p39 = por %p37, %p38
      %p40 = scmp.ne.s32.totalorder %s29, %s32
      %p41 = scmp.eq.s32.totalorder %s24, 3
      %p42 = por %p40, %p41
      %p43 = scmp.ne.s32.totalorder %s32, %s33
      %p44 = scmp.eq.s32.totalorder %s24, 0
      %p45 = por %p43, %p44
      %p46 = scmp.ne.s32.totalorder %s32, %s33
      %p47 = scmp.eq.s32.totalorder %s25, 3
      %p48 = por %p46, %p47
      %p50 = scmp.ne.s32.totalorder %s33, %s49
      %p51 = scmp.eq.s32.totalorder %s25, 0
      %p52 = por %p50, %p51
      %s54 = sadd.s32 %s53, 1
      %p57 = scmp.eq.s32.totalorder %s19, 3
      %p58 = scmp.ne.s32.totalorder %s53, %s55
      %p59 = scmp.eq.s32.totalorder %s19, 0
      %p60 = por %p58, %p59
      %p61 = scmp.ne.s32.totalorder %s53, %s55
      %p62 = scmp.eq.s32.totalorder %s24, 3
      %p63 = por %p61, %p62
      %p64 = scmp.ne.s32.totalorder %s55, %s56
      %p65 = scmp.eq.s32.totalorder %s24, 0
      %p66 = por %p64, %p65
      %p67 = scmp.ne.s32.totalorder %s55, %s56
      %p68 = scmp.eq.s32.totalorder %s25, 3
      %p69 = por %p67, %p68
      %p71 = scmp.ne.s32.totalorder %s56, %s70
      %p72 = scmp.eq.s32.totalorder %s25, 0
      %p73 = por %p71, %p72
      %s75 = sadd.s32 %s74, 1
      %p78 = scmp.eq.s32.totalorder %s19, 3
      %p79 = scmp.ne.s32.totalorder %s74, %s76
      %p80 = scmp.eq.s32.totalorder %s19, 0
      %p81 = por %p79, %p80
      %p82 = scmp.ne.s32.totalorder %s74, %s76
      %p83 = scmp.eq.s32.totalorder %s24, 3
      %p84 = por %p82, %p83
      %p85 = scmp.ne.s32.totalorder %s76, %s77
      %p86 = scmp.eq.s32.totalorder %s24, 0
      %p87 = por %p85, %p86
      %p88 = scmp.ne.s32.totalorder %s76, %s77
      %p89 = scmp.eq.s32.totalorder %s25, 3
      %p90 = por %p88, %p89
      %p92 = scmp.ne.s32.totalorder %s77, %s91
      %p93 = scmp.eq.s32.totalorder %s25, 0
      %p94 = por %p92, %p93
      %s96 = sadd.s32 %s95, 1
      %p99 = scmp.eq.s32.totalorder %s19, 3
      %p100 = scmp.ne.s32.totalorder %s95, %s97
      %p101 = scmp.eq.s32.totalorder %s19, 0
      %p102 = por %p100, %p101
      %p103 = scmp.ne.s32.totalorder %s95, %s97
      %p104 = scmp.eq.s32.totalorder %s24, 3
      %p105 = por %p103, %p104
      %p106 = scmp.ne.s32.totalorder %s97, %s98
      %p107 = scmp.eq.s32.totalorder %s24, 0
      %p108 = por %p106, %p107
      %p109 = scmp.ne.s32.totalorder %s97, %s98
      %p110 = scmp.eq.s32.totalorder %s25, 3
      %p111 = por %p109, %p110
      %p113 = scmp.ne.s32.totalorder %s98, %s112
      %p114 = scmp.eq.s32.totalorder %s25, 0
      %p115 = por %p113, %p114
      %s117 = sadd.s32 %s116, 1
      %p120 = scmp.eq.s32.totalorder %s19, 3
      %p121 = scmp.ne.s32.totalorder %s116, %s118
      %p122 = scmp.eq.s32.totalorder %s19, 0
      %p123 = por %p121, %p122
      %p124 = scmp.ne.s32.totalorder %s116, %s118
      %p125 = scmp.eq.s32.totalorder %s24, 3
      %p126 = por %p124, %p125
      %p127 = scmp.ne.s32.totalorder %s118, %s119
      %p128 = scmp.eq.s32.totalorder %s24, 0
      %p129 = por %p127, %p128
      %p130 = scmp.ne.s32.totalorder %s118, %s119
      %p131 = scmp.eq.s32.totalorder %s25, 3
      %p132 = por %p130, %p131
      %p134 = scmp.ne.s32.totalorder %s119, %s133
      %p135 = scmp.eq.s32.totalorder %s25, 0
      %p136 = por %p134, %p135
      %s138 = sadd.s32 %s137, 1
      %p141 = scmp.eq.s32.totalorder %s19, 3
      %p142 = scmp.ne.s32.totalorder %s137, %s139
      %p143 = scmp.eq.s32.totalorder %s19, 0
      %p144 = por %p142, %p143
      %p145 = scmp.ne.s32.totalorder %s137, %s139
      %p146 = scmp.eq.s32.totalorder %s24, 3
      %p147 = por %p145, %p146
      %p148 = scmp.ne.s32.totalorder %s139, %s140
      %p149 = scmp.eq.s32.totalorder %s24, 0
      %p150 = por %p148, %p149
      %p151 = scmp.ne.s32.totalorder %s139, %s140
      %p152 = scmp.eq.s32.totalorder %s25, 3
      %p153 = por %p151, %p152
      %p155 = scmp.ne.s32.totalorder %s140, %s154
      %p156 = scmp.eq.s32.totalorder %s25, 0
      %p157 = por %p155, %p156
      %s159 = sadd.s32 %s158, 1
      %p162 = scmp.eq.s32.totalorder %s19, 3
      %p163 = scmp.ne.s32.totalorder %s158, %s160
      %p164 = scmp.eq.s32.totalorder %s19, 0
      %p165 = por %p163, %p164
      %p166 = scmp.ne.s32.totalorder %s158, %s160
      %p167 = scmp.eq.s32.totalorder %s24, 3
      %p168 = por %p166, %p167
      %p169 = scmp.ne.s32.totalorder %s160, %s161
      %p170 = scmp.eq.s32.totalorder %s24, 0
      %p171 = por %p169, %p170
      %p172 = scmp.ne.s32.totalorder %s160, %s161
      %p173 = scmp.eq.s32.totalorder %s25, 3
      %p174 = por %p172, %p173
      %p176 = scmp.ne.s32.totalorder %s161, %s175
      %p177 = scmp.eq.s32.totalorder %s25, 0
      %p178 = por %p176, %p177
      %s179 = ssub.s32 %s19, %s26
      %p180 = scmp.eq.s32.totalorder %s179, 0
      %s182 = sadd.s32 %s181, 1
      %s183 = scalar_select %p180, %s181, %s182
      %p186 = pneg %p180
      %p187 = scmp.eq.s32.totalorder %s19, 3
      %p188 = por %p186, %p187
      %p189 = scmp.ne.s32.totalorder %s181, %s184
      %p190 = scmp.eq.s32.totalorder %s19, 0
      %p191 = por %p189, %p190
      %p192 = scmp.ne.s32.totalorder %s181, %s184
      %p193 = scmp.eq.s32.totalorder %s24, 3
      %p194 = por %p192, %p193
      %p195 = scmp.ne.s32.totalorder %s184, %s185
      %p196 = scmp.eq.s32.totalorder %s24, 0
      %p197 = por %p195, %p196
      %p198 = scmp.ne.s32.totalorder %s184, %s185
      %p199 = scmp.eq.s32.totalorder %s25, 3
      %p200 = por %p198, %p199
      %p202 = scmp.ne.s32.totalorder %s185, %s201
      %p203 = scmp.eq.s32.totalorder %s25, 0
      %p204 = por %p202, %p203
      %p205 = scmp.le.s32.totalorder 1, %s19
      %p206 = scmp.lt.s32.totalorder %s19, 5
      %p207 = pnand %p205, %p206
      %p208 = pneg %p207
      // Predicated region
      $region9: #{tpu_custom_call.1} parent=5 // pred_check
        _
      $region10: #{tpu_custom_call.1} parent=5 // pred_check_branch
        %210 = sbr.rel (%p207) target = $region12
      $region11: #{tpu_custom_call.1} parent=5 // pred_region
        %s211 = ssub.s32 %s19, 1
        // Predicated region
        $region13: #{tpu_custom_call.1} parent=11 // pred_check
          %p212 = pneg %p66
        $region14: #{tpu_custom_call.1} parent=11 // pred_check_branch
          %214 = sbr.rel (%p212) target = $region16
        $region15: #{tpu_custom_call.1} parent=11 // pred_region
          _
        $region16: #{tpu_custom_call.1} parent=11 // pred_fallthru
          _
        // Predicated region
        $region17: #{tpu_custom_call.1} parent=11 // pred_check
          %p215 = pneg %p87
        $region18: #{tpu_custom_call.1} parent=11 // pred_check_branch
          %217 = sbr.rel (%p215) target = $region20
        $region19: #{tpu_custom_call.1} parent=11 // pred_region
          _
        $region20: #{tpu_custom_call.1} parent=11 // pred_fallthru
          _
        // Predicated region
        $region21: #{tpu_custom_call.1} parent=11 // pred_check
          %p218 = pneg %p108
        $region22: #{tpu_custom_call.1} parent=11 // pred_check_branch
          %220 = sbr.rel (%p218) target = $region24
        $region23: #{tpu_custom_call.1} parent=11 // pred_region
          _
        $region24: #{tpu_custom_call.1} parent=11 // pred_fallthru
          _
        // Predicated region
        $region25: #{tpu_custom_call.1} parent=11 // pred_check
          %p221 = pneg %p129
        $region26: #{tpu_custom_call.1} parent=11 // pred_check_branch
          %223 = sbr.rel (%p221) target = $region28
        $region27: #{tpu_custom_call.1} parent=11 // pred_region
          _
        $region28: #{tpu_custom_call.1} parent=11 // pred_fallthru
          _
        // Predicated region
        $region29: #{tpu_custom_call.1} parent=11 // pred_check
          %p224 = pneg %p150
        $region30: #{tpu_custom_call.1} parent=11 // pred_check_branch
          %226 = sbr.rel (%p224) target = $region32
        $region31: #{tpu_custom_call.1} parent=11 // pred_region
          _
        $region32: #{tpu_custom_call.1} parent=11 // pred_fallthru
          _
        // Predicated region
        $region33: #{tpu_custom_call.1} parent=11 // pred_check
          %p227 = pneg %p171
        $region34: #{tpu_custom_call.1} parent=11 // pred_check_branch
          %229 = sbr.rel (%p227) target = $region36
        $region35: #{tpu_custom_call.1} parent=11 // pred_region
          _
        $region36: #{tpu_custom_call.1} parent=11 // pred_fallthru
          _
      $region12: #{tpu_custom_call.1} parent=5 // pred_fallthru
        _
      %p230 = scmp.lt.s32.totalorder %s19, 4
      // Predicated region
      $region37: #{tpu_custom_call.1} parent=5 // pred_check
        %p231 = pneg %p230
      $region38: #{tpu_custom_call.1} parent=5 // pred_check_branch
        %233 = sbr.rel (%p231) target = $region40
      $region39: #{tpu_custom_call.1} parent=5 // pred_region
        // Predicated region
        $region41: #{tpu_custom_call.1} parent=39 // pred_check
          %p234 = pneg %p39
        $region42: #{tpu_custom_call.1} parent=39 // pred_check_branch
          %236 = sbr.rel (%p234) target = $region44
        $region43: #{tpu_custom_call.1} parent=39 // pred_region
          %s237 = sand.u32 %s29, 1
          %s238 = scalar_lea.sflag [#allocation4], %s237
          %s239 = sand.u32 %s29, 1
          %s240 = smul.addr %s239, 128
          %s241 = scalar_lea.vmem [#allocation3], %s240
          %s242 = smul.u32 4, %s19
          %244 = vsyncadd %s238, 0
          %s245 = smul.addr %s242, 8
          %s246 = smul.addr %s245, 4
          %s247 = scalar_lea.hbm %s0, %s246
          %s248 = sshll.u32 %s247, 4
          %s249 = int_to_ptr.hbm [resolvable:$true] %s248
          %s250 = sshll.u32 %s241, 4
          %s251 = int_to_ptr.vmem [resolvable:$true] %s250
          %256 = dma.hbm_to_vmem [thread:$0]  %s249, 2048, %s251, %s238, 64, 64, 4
        $region44: #{tpu_custom_call.1} parent=39 // pred_fallthru
          _
      $region40: #{tpu_custom_call.1} parent=5 // pred_fallthru
        _
      %p257 = scmp.le.s32.totalorder 1, %s19
      %p258 = scmp.lt.s32.totalorder %s19, 5
      %p259 = pnand %p257, %p258
      %p260 = pneg %p259
      // Predicated region
      $region45: #{tpu_custom_call.1} parent=5 // pred_check
        _
      $region46: #{tpu_custom_call.1} parent=5 // pred_check_branch
        %262 = sbr.rel (%p259) target = $region48
      $region47: #{tpu_custom_call.1} parent=5 // pred_region
        %s263 = ssub.s32 %s19, 1
        %s264 = sand.u32 %s32, 1
        %s265 = scalar_lea.sflag [#allocation4], %s264
        %s266 = sand.u32 %s32, 1
        %s267 = smul.addr %s266, 128
        %s268 = scalar_lea.vmem [#allocation3], %s267
        // Predicated region
        $region49: #{tpu_custom_call.1} parent=47 // pred_check
          %p269 = pneg %p45
        $region50: #{tpu_custom_call.1} parent=47 // pred_check_branch
          %271 = sbr.rel (%p269) target = $region52
        $region51: #{tpu_custom_call.1} parent=47 // pred_region
          %273 = dma.done %s265, 2048
        $region52: #{tpu_custom_call.1} parent=47 // pred_fallthru
          _
        %s274 = sand.u32 %s32, 1
        %s275 = scalar_lea.sflag [#allocation4], %s274
        %s276 = sand.u32 %s32, 1
        %s277 = smul.addr %s276, 128
        %s278 = scalar_lea.vmem [#allocation3], %s277
        %p279 = pneg %p45
        %p280 = pneg %p42
        %p281 = pneg %p66
        %p282 = pneg %p63
        %p283 = pneg %p87
        %p284 = pneg %p84
        %p285 = pneg %p108
        %p286 = pneg %p105
        %p287 = pneg %p129
        %p288 = pneg %p126
        %p289 = pneg %p150
        %p290 = pneg %p147
        %p291 = pneg %p171
        %p292 = pneg %p168
        %p293 = pneg %p197
        %p294 = pneg %p194
        %s295 = sand.u32 %s184, 1
        %s296 = scalar_lea.sflag [#allocation5], %s295
        %s297 = sand.u32 %s184, 1
        %s298 = smul.addr %s297, 128
        %s299 = scalar_lea.vmem [#allocation6], %s298
        %s300 = smul.u32 4, %s24
        %s301 = smul.u32 4, %s24
        %v303 = vld [vmem:[%s268] sm:$0xf]
        %v304 = vld [vmem:[%s268 + $0x4] sm:$0xf]
        %v305 = vld [vmem:[%s268 + $0x8] sm:$0xf]
        %v306 = vld [vmem:[%s268 + $0xc] sm:$0xf]
        %v307 = vld [vmem:[%s268 + $0x10] sm:$0xf]
        %v308 = vld [vmem:[%s268 + $0x14] sm:$0xf]
        %v309 = vld [vmem:[%s268 + $0x18] sm:$0xf]
        %v310 = vld [vmem:[%s268 + $0x1c] sm:$0xf]
        %v311 = vld [vmem:[%s268 + $0x20] sm:$0xf]
        %v312 = vld [vmem:[%s268 + $0x24] sm:$0xf]
        %v313 = vld [vmem:[%s268 + $0x28] sm:$0xf]
        %v314 = vld [vmem:[%s268 + $0x2c] sm:$0xf]
        %v315 = vld [vmem:[%s268 + $0x30] sm:$0xf]
        %v316 = vld [vmem:[%s268 + $0x34] sm:$0xf]
        %v317 = vld [vmem:[%s268 + $0x38] sm:$0xf]
        %v318 = vld [vmem:[%s268 + $0x3c] sm:$0xf]
        %v319 = vld [vmem:[%s268 + $0x40] sm:$0xf]
        %v320 = vld [vmem:[%s268 + $0x44] sm:$0xf]
        %v321 = vld [vmem:[%s268 + $0x48] sm:$0xf]
        %v322 = vld [vmem:[%s268 + $0x4c] sm:$0xf]
        %v323 = vld [vmem:[%s268 + $0x50] sm:$0xf]
        %v324 = vld [vmem:[%s268 + $0x54] sm:$0xf]
        %v325 = vld [vmem:[%s268 + $0x58] sm:$0xf]
        %v326 = vld [vmem:[%s268 + $0x5c] sm:$0xf]
        %v327 = vld [vmem:[%s268 + $0x60] sm:$0xf]
        %v328 = vld [vmem:[%s268 + $0x64] sm:$0xf]
        %v329 = vld [vmem:[%s268 + $0x68] sm:$0xf]
        %v330 = vld [vmem:[%s268 + $0x6c] sm:$0xf]
        %v331 = vld [vmem:[%s268 + $0x70] sm:$0xf]
        %v332 = vld [vmem:[%s268 + $0x74] sm:$0xf]
        %v333 = vld [vmem:[%s268 + $0x78] sm:$0xf]
        %v334 = vld [vmem:[%s268 + $0x7c] sm:$0xf]
        %v335 = vld [vmem:[%s1] sm:$0xf]
        %v336 = vld [vmem:[%s1 + $0x4] sm:$0xf]
        %v337 = vld [vmem:[%s1 + $0x8] sm:$0xf]
        %v338 = vld [vmem:[%s1 + $0xc] sm:$0xf]
        %v339 = vld [vmem:[%s1 + $0x10] sm:$0xf]
        %v340 = vld [vmem:[%s1 + $0x14] sm:$0xf]
        %v341 = vld [vmem:[%s1 + $0x18] sm:$0xf]
        %v342 = vld [vmem:[%s1 + $0x1c] sm:$0xf]
        %v343 = vld [vmem:[%s1 + $0x20] sm:$0xf]
        %v344 = vld [vmem:[%s1 + $0x24] sm:$0xf]
        %v345 = vld [vmem:[%s1 + $0x28] sm:$0xf]
        %v346 = vld [vmem:[%s1 + $0x2c] sm:$0xf]
        %v347 = vld [vmem:[%s1 + $0x30] sm:$0xf]
        %v348 = vld [vmem:[%s1 + $0x34] sm:$0xf]
        %v349 = vld [vmem:[%s1 + $0x38] sm:$0xf]
        %v350 = vld [vmem:[%s1 + $0x3c] sm:$0xf]
        %v351 = vld [vmem:[%s2] sm:$0x1]
        %v353 = vperm.slane %v351, 0
        %v387 = vunpack.c.l.b16 %v303
        %v388 = vunpack.c.l.b16 %v304
        %v389 = vunpack.c.l.b16 %v305
        %v390 = vunpack.c.l.b16 %v306
        %v391 = vunpack.c.l.b16 %v307
        %v392 = vunpack.c.l.b16 %v308
        %v393 = vunpack.c.l.b16 %v309
        %v394 = vunpack.c.l.b16 %v310
        %v395 = vunpack.c.l.b16 %v311
        %v396 = vunpack.c.l.b16 %v312
        %v397 = vunpack.c.l.b16 %v313
        %v398 = vunpack.c.l.b16 %v314
        %v399 = vunpack.c.l.b16 %v315
        %v400 = vunpack.c.l.b16 %v316
        %v401 = vunpack.c.l.b16 %v317
        %v402 = vunpack.c.l.b16 %v318
        %v403 = vunpack.c.l.b16 %v319
        %v404 = vunpack.c.l.b16 %v320
        %v405 = vunpack.c.l.b16 %v321
        %v406 = vunpack.c.l.b16 %v322
        %v407 = vunpack.c.l.b16 %v323
        %v408 = vunpack.c.l.b16 %v324
        %v409 = vunpack.c.l.b16 %v325
        %v410 = vunpack.c.l.b16 %v326
        %v411 = vunpack.c.l.b16 %v327
        %v412 = vunpack.c.l.b16 %v328
        %v413 = vunpack.c.l.b16 %v329
        %v414 = vunpack.c.l.b16 %v330
        %v415 = vunpack.c.l.b16 %v331
        %v416 = vunpack.c.l.b16 %v332
        %v417 = vunpack.c.l.b16 %v333
        %v418 = vunpack.c.l.b16 %v334
        %v419 = vpack.c.b16 %v388, %v387
        %v420 = vpack.c.b16 %v390, %v389
        %v421 = vpack.c.b16 %v392, %v391
        %v422 = vpack.c.b16 %v394, %v393
        %v423 = vpack.c.b16 %v396, %v395
        %v424 = vpack.c.b16 %v398, %v397
        %v425 = vpack.c.b16 %v400, %v399
        %v426 = vpack.c.b16 %v402, %v401
        %v427 = vpack.c.b16 %v404, %v403
        %v428 = vpack.c.b16 %v406, %v405
        %v429 = vpack.c.b16 %v408, %v407
        %v430 = vpack.c.b16 %v410, %v409
        %v431 = vpack.c.b16 %v412, %v411
        %v432 = vpack.c.b16 %v414, %v413
        %v433 = vpack.c.b16 %v416, %v415
        %v434 = vpack.c.b16 %v418, %v417
        %v467 = vunpack.c.l.b16 %v335
        %v468 = vunpack.c.l.b16 %v336
        %v469 = vunpack.c.l.b16 %v337
        %v470 = vunpack.c.l.b16 %v338
        %v471 = vunpack.c.l.b16 %v339
        %v472 = vunpack.c.l.b16 %v340
        %v473 = vunpack.c.l.b16 %v341
        %v474 = vunpack.c.l.b16 %v342
        %v475 = vunpack.c.l.b16 %v343
        %v476 = vunpack.c.l.b16 %v344
        %v477 = vunpack.c.l.b16 %v345
        %v478 = vunpack.c.l.b16 %v346
        %v479 = vunpack.c.l.b16 %v347
        %v480 = vunpack.c.l.b16 %v348
        %v481 = vunpack.c.l.b16 %v349
        %v482 = vunpack.c.l.b16 %v350
        %v483 = vpack.c.b16 %v468, %v467
        %v484 = vpack.c.b16 %v470, %v469
        %v485 = vpack.c.b16 %v472, %v471
        %v486 = vpack.c.b16 %v474, %v473
        %v487 = vpack.c.b16 %v476, %v475
        %v488 = vpack.c.b16 %v478, %v477
        %v489 = vpack.c.b16 %v480, %v479
        %v490 = vpack.c.b16 %v482, %v481
        %499 = vmatpush.bf16.msra.mxu0 %v490
        %500 = vmatpush.bf16.msra.mxu0 %v489
        %501 = vmatpush.bf16.msra.mxu0 %v488
        %502 = vmatpush.bf16.msra.mxu0 %v487
        %503 = vmatpush.bf16.msra.mxu0 %v486
        %504 = vmatpush.bf16.msra.mxu0 %v485
        %505 = vmatpush.bf16.msra.mxu0 %v484
        %506 = vmatpush.bf16.msra.mxu0 %v483
        %507 = vmatmul.bf16.gmra.mxu0 %v419
        %v508 = vpop.f32.mrf.mxu0
        %v509 = vadd.f32 %v353, %v508
        %v510 = vpop.f32.mrf.mxu0
        %v511 = vadd.f32 %v353, %v510
        %512 = vmatmul.bf16.gmra.mxu0 %v420
        %v513 = vpop.f32.mrf.mxu0
        %v514 = vadd.f32 %v353, %v513
        %v515 = vpop.f32.mrf.mxu0
        %v516 = vadd.f32 %v353, %v515
        %517 = vmatmul.bf16.gmra.mxu0 %v421
        %v518 = vpop.f32.mrf.mxu0
        %v519 = vadd.f32 %v353, %v518
        %v520 = vpop.f32.mrf.mxu0
        %v521 = vadd.f32 %v353, %v520
        %522 = vmatmul.bf16.gmra.mxu0 %v422
        %v523 = vpop.f32.mrf.mxu0
        %v524 = vadd.f32 %v353, %v523
        %v525 = vpop.f32.mrf.mxu0
        %v526 = vadd.f32 %v353, %v525
        %527 = vmatmul.bf16.gmra.mxu0 %v423
        %v528 = vpop.f32.mrf.mxu0
        %v529 = vadd.f32 %v353, %v528
        %v530 = vpop.f32.mrf.mxu0
        %v531 = vadd.f32 %v353, %v530
        %532 = vmatmul.bf16.gmra.mxu0 %v424
        %v533 = vpop.f32.mrf.mxu0
        %v534 = vadd.f32 %v353, %v533
        %v535 = vpop.f32.mrf.mxu0
        %v536 = vadd.f32 %v353, %v535
        %537 = vmatmul.bf16.gmra.mxu0 %v425
        %v538 = vpop.f32.mrf.mxu0
        %v539 = vadd.f32 %v353, %v538
        %v540 = vpop.f32.mrf.mxu0
        %v541 = vadd.f32 %v353, %v540
        %542 = vmatmul.bf16.gmra.mxu0 %v426
        %v543 = vpop.f32.mrf.mxu0
        %v544 = vadd.f32 %v353, %v543
        %v545 = vpop.f32.mrf.mxu0
        %v546 = vadd.f32 %v353, %v545
        %547 = vmatmul.bf16.gmra.mxu0 %v427
        %v548 = vpop.f32.mrf.mxu0
        %v549 = vadd.f32 %v353, %v548
        %v550 = vpop.f32.mrf.mxu0
        %v551 = vadd.f32 %v353, %v550
        %552 = vmatmul.bf16.gmra.mxu0 %v428
        %v553 = vpop.f32.mrf.mxu0
        %v554 = vadd.f32 %v353, %v553
        %v555 = vpop.f32.mrf.mxu0
        %v556 = vadd.f32 %v353, %v555
        %557 = vmatmul.bf16.gmra.mxu0 %v429
        %v558 = vpop.f32.mrf.mxu0
        %v559 = vadd.f32 %v353, %v558
        %v560 = vpop.f32.mrf.mxu0
        %v561 = vadd.f32 %v353, %v560
        %562 = vmatmul.bf16.gmra.mxu0 %v430
        %v563 = vpop.f32.mrf.mxu0
        %v564 = vadd.f32 %v353, %v563
        %v565 = vpop.f32.mrf.mxu0
        %v566 = vadd.f32 %v353, %v565
        %567 = vmatmul.bf16.gmra.mxu0 %v431
        %v568 = vpop.f32.mrf.mxu0
        %v569 = vadd.f32 %v353, %v568
        %v570 = vpop.f32.mrf.mxu0
        %v571 = vadd.f32 %v353, %v570
        %572 = vmatmul.bf16.gmra.mxu0 %v432
        %v573 = vpop.f32.mrf.mxu0
        %v574 = vadd.f32 %v353, %v573
        %v575 = vpop.f32.mrf.mxu0
        %v576 = vadd.f32 %v353, %v575
        %577 = vmatmul.bf16.gmra.mxu0 %v433
        %v578 = vpop.f32.mrf.mxu0
        %v579 = vadd.f32 %v353, %v578
        %v580 = vpop.f32.mrf.mxu0
        %v581 = vadd.f32 %v353, %v580
        %582 = vmatmul.bf16.gmra.mxu0 %v434
        %v583 = vpop.f32.mrf.mxu0
        %v584 = vadd.f32 %v353, %v583
        %v585 = vpop.f32.mrf.mxu0
        %v586 = vadd.f32 %v353, %v585
        %587 = vdwg.mxu0
        %v588 = vmax.f32 %v509, 0.0
        %v589 = vmax.f32 %v511, 0.0
        %v590 = vmax.f32 %v514, 0.0
        %v591 = vmax.f32 %v516, 0.0
        %v592 = vmax.f32 %v519, 0.0
        %v593 = vmax.f32 %v521, 0.0
        %v594 = vmax.f32 %v524, 0.0
        %v595 = vmax.f32 %v526, 0.0
        %v596 = vmax.f32 %v529, 0.0
        %v597 = vmax.f32 %v531, 0.0
        %v598 = vmax.f32 %v534, 0.0
        %v599 = vmax.f32 %v536, 0.0
        %v600 = vmax.f32 %v539, 0.0
        %v601 = vmax.f32 %v541, 0.0
        %v602 = vmax.f32 %v544, 0.0
        %v603 = vmax.f32 %v546, 0.0
        %v604 = vmax.f32 %v549, 0.0
        %v605 = vmax.f32 %v551, 0.0
        %v606 = vmax.f32 %v554, 0.0
        %v607 = vmax.f32 %v556, 0.0
        %v608 = vmax.f32 %v559, 0.0
        %v609 = vmax.f32 %v561, 0.0
        %v610 = vmax.f32 %v564, 0.0
        %v611 = vmax.f32 %v566, 0.0
        %v612 = vmax.f32 %v569, 0.0
        %v613 = vmax.f32 %v571, 0.0
        %v614 = vmax.f32 %v574, 0.0
        %v615 = vmax.f32 %v576, 0.0
        %v616 = vmax.f32 %v579, 0.0
        %v617 = vmax.f32 %v581, 0.0
        %v618 = vmax.f32 %v584, 0.0
        %v619 = vmax.f32 %v586, 0.0
        %vm620 = vcmask 257024
        %621 = vst.msk [vmem:[#allocation2] sm:$0xf] %vm620, 0
        %622 = vst.msk [vmem:[#allocation2 + $0x4] sm:$0xf] %vm620, 0
        %623 = vst.msk [vmem:[#allocation2 + $0x50] sm:$0xf] %vm620, 0
        %624 = vst.msk [vmem:[#allocation2 + $0x54] sm:$0xf] %vm620, 0
        %625 = vst.msk [vmem:[#allocation2 + $0xa0] sm:$0xf] %vm620, 0
        %626 = vst.msk [vmem:[#allocation2 + $0xa4] sm:$0xf] %vm620, 0
        %627 = vst.msk [vmem:[#allocation2 + $0xf0] sm:$0xf] %vm620, 0
        %628 = vst.msk [vmem:[#allocation2 + $0xf4] sm:$0xf] %vm620, 0
        %s629 = scalar_lea.vmem [#allocation2], 72
        %630 = vst.msk [vmem:[%s629] sm:$0xf] %vm620, 0
        %631 = vst.msk [vmem:[%s629 + $0x4] sm:$0xf] %vm620, 0
        %632 = vst.msk [vmem:[%s629 + $0x50] sm:$0xf] %vm620, 0
        %633 = vst.msk [vmem:[%s629 + $0x54] sm:$0xf] %vm620, 0
        %634 = vst.msk [vmem:[%s629 + $0xa0] sm:$0xf] %vm620, 0
        %635 = vst.msk [vmem:[%s629 + $0xa4] sm:$0xf] %vm620, 0
        %636 = vst.msk [vmem:[%s629 + $0xf0] sm:$0xf] %vm620, 0
        %637 = vst.msk [vmem:[%s629 + $0xf4] sm:$0xf] %vm620, 0
        %638 = vst.msk [vmem:[#allocation2 + $0x4] sm:$0xf] %vm620, 0
        %639 = vst.msk [vmem:[#allocation2 + $0xc] sm:$0xf] %vm620, 0
        %640 = vst.msk [vmem:[#allocation2 + $0x14] sm:$0xf] %vm620, 0
        %641 = vst.msk [vmem:[#allocation2 + $0x1c] sm:$0xf] %vm620, 0
        %642 = vst.msk [vmem:[#allocation2 + $0x24] sm:$0xf] %vm620, 0
        %643 = vst.msk [vmem:[#allocation2 + $0x2c] sm:$0xf] %vm620, 0
        %644 = vst.msk [vmem:[#allocation2 + $0x34] sm:$0xf] %vm620, 0
        %645 = vst.msk [vmem:[#allocation2 + $0x3c] sm:$0xf] %vm620, 0
        %646 = vst.msk [vmem:[#allocation2 + $0x44] sm:$0xf] %vm620, 0
        %647 = vst.msk [vmem:[#allocation2 + $0x4c] sm:$0xf] %vm620, 0
        %648 = vst.msk [vmem:[#allocation2 + $0x54] sm:$0xf] %vm620, 0
        %649 = vst.msk [vmem:[#allocation2 + $0x5c] sm:$0xf] %vm620, 0
        %650 = vst.msk [vmem:[#allocation2 + $0x64] sm:$0xf] %vm620, 0
        %651 = vst.msk [vmem:[#allocation2 + $0x6c] sm:$0xf] %vm620, 0
        %652 = vst.msk [vmem:[#allocation2 + $0x74] sm:$0xf] %vm620, 0
        %653 = vst.msk [vmem:[#allocation2 + $0x7c] sm:$0xf] %vm620, 0
        %654 = vst.msk [vmem:[#allocation2 + $0x84] sm:$0xf] %vm620, 0
        %655 = vst.msk [vmem:[#allocation2 + $0x8c] sm:$0xf] %vm620, 0
        %656 = vst.msk [vmem:[#allocation2 + $0x94] sm:$0xf] %vm620, 0
        %657 = vst.msk [vmem:[#allocation2 + $0x9c] sm:$0xf] %vm620, 0
        %658 = vst.msk [vmem:[#allocation2 + $0xa4] sm:$0xf] %vm620, 0
        %659 = vst.msk [vmem:[#allocation2 + $0xac] sm:$0xf] %vm620, 0
        %660 = vst.msk [vmem:[#allocation2 + $0xb4] sm:$0xf] %vm620, 0
        %661 = vst.msk [vmem:[#allocation2 + $0xbc] sm:$0xf] %vm620, 0
        %662 = vst.msk [vmem:[#allocation2 + $0xc4] sm:$0xf] %vm620, 0
        %663 = vst.msk [vmem:[#allocation2 + $0xcc] sm:$0xf] %vm620, 0
        %664 = vst.msk [vmem:[#allocation2 + $0xd4] sm:$0xf] %vm620, 0
        %665 = vst.msk [vmem:[#allocation2 + $0xdc] sm:$0xf] %vm620, 0
        %666 = vst.msk [vmem:[#allocation2 + $0xe4] sm:$0xf] %vm620, 0
        %667 = vst.msk [vmem:[#allocation2 + $0xec] sm:$0xf] %vm620, 0
        %668 = vst.msk [vmem:[#allocation2 + $0xf4] sm:$0xf] %vm620, 0
        %669 = vst.msk [vmem:[#allocation2 + $0xfc] sm:$0xf] %vm620, 0
        %670 = vst.msk [vmem:[#allocation2 + $0x104] sm:$0xf] %vm620, 0
        %671 = vst.msk [vmem:[#allocation2 + $0x10c] sm:$0xf] %vm620, 0
        %672 = vst.msk [vmem:[#allocation2 + $0x114] sm:$0xf] %vm620, 0
        %673 = vst.msk [vmem:[#allocation2 + $0x11c] sm:$0xf] %vm620, 0
        %674 = vst.msk [vmem:[#allocation2 + $0x124] sm:$0xf] %vm620, 0
        %675 = vst.msk [vmem:[#allocation2 + $0x12c] sm:$0xf] %vm620, 0
        %676 = vst.msk [vmem:[#allocation2 + $0x134] sm:$0xf] %vm620, 0
        %677 = vst.msk [vmem:[#allocation2 + $0x13c] sm:$0xf] %vm620, 0
        %v678 = vpack.c.bf16 %v588, %v588
        %v679 = vpack.c.bf16 %v589, %v589
        %v680 = vpack.c.bf16 %v590, %v590
        %v681 = vpack.c.bf16 %v591, %v591
        %v682 = vpack.c.bf16 %v592, %v592
        %v683 = vpack.c.bf16 %v593, %v593
        %v684 = vpack.c.bf16 %v594, %v594
        %v685 = vpack.c.bf16 %v595, %v595
        %v686 = vpack.c.bf16 %v596, %v596
        %v687 = vpack.c.bf16 %v597, %v597
        %v688 = vpack.c.bf16 %v598, %v598
        %v689 = vpack.c.bf16 %v599, %v599
        %v690 = vpack.c.bf16 %v600, %v600
        %v691 = vpack.c.bf16 %v601, %v601
        %v692 = vpack.c.bf16 %v602, %v602
        %v693 = vpack.c.bf16 %v603, %v603
        %v694 = vpack.c.bf16 %v604, %v604
        %v695 = vpack.c.bf16 %v605, %v605
        %v696 = vpack.c.bf16 %v606, %v606
        %v697 = vpack.c.bf16 %v607, %v607
        %v698 = vpack.c.bf16 %v608, %v608
        %v699 = vpack.c.bf16 %v609, %v609
        %v700 = vpack.c.bf16 %v610, %v610
        %v701 = vpack.c.bf16 %v611, %v611
        %v702 = vpack.c.bf16 %v612, %v612
        %v703 = vpack.c.bf16 %v613, %v613
        %v704 = vpack.c.bf16 %v614, %v614
        %v705 = vpack.c.bf16 %v615, %v615
        %v706 = vpack.c.bf16 %v616, %v616
        %v707 = vpack.c.bf16 %v617, %v617
        %v708 = vpack.c.bf16 %v618, %v618
        %v709 = vpack.c.bf16 %v619, %v619
        %s710 = scalar_lea.vmem [#allocation2], 8
        %711 = vst.msk [vmem:[%s710] sm:$0xf] %vm620, %v678
        %712 = vst.msk [vmem:[%s710 + $0x8] sm:$0xf] %vm620, %v679
        %713 = vst.msk [vmem:[%s710 + $0x10] sm:$0xf] %vm620, %v680
        %714 = vst.msk [vmem:[%s710 + $0x18] sm:$0xf] %vm620, %v681
        %715 = vst.msk [vmem:[%s710 + $0x20] sm:$0xf] %vm620, %v682
        %716 = vst.msk [vmem:[%s710 + $0x28] sm:$0xf] %vm620, %v683
        %717 = vst.msk [vmem:[%s710 + $0x30] sm:$0xf] %vm620, %v684
        %718 = vst.msk [vmem:[%s710 + $0x38] sm:$0xf] %vm620, %v685
        %719 = vst.msk [vmem:[%s710 + $0x50] sm:$0xf] %vm620, %v686
        %720 = vst.msk [vmem:[%s710 + $0x58] sm:$0xf] %vm620, %v687
        %721 = vst.msk [vmem:[%s710 + $0x60] sm:$0xf] %vm620, %v688
        %722 = vst.msk [vmem:[%s710 + $0x68] sm:$0xf] %vm620, %v689
        %723 = vst.msk [vmem:[%s710 + $0x70] sm:$0xf] %vm620, %v690
        %724 = vst.msk [vmem:[%s710 + $0x78] sm:$0xf] %vm620, %v691
        %725 = vst.msk [vmem:[%s710 + $0x80] sm:$0xf] %vm620, %v692
        %726 = vst.msk [vmem:[%s710 + $0x88] sm:$0xf] %vm620, %v693
        %727 = vst.msk [vmem:[%s710 + $0xa0] sm:$0xf] %vm620, %v694
        %728 = vst.msk [vmem:[%s710 + $0xa8] sm:$0xf] %vm620, %v695
        %729 = vst.msk [vmem:[%s710 + $0xb0] sm:$0xf] %vm620, %v696
        %730 = vst.msk [vmem:[%s710 + $0xb8] sm:$0xf] %vm620, %v697
        %731 = vst.msk [vmem:[%s710 + $0xc0] sm:$0xf] %vm620, %v698
        %732 = vst.msk [vmem:[%s710 + $0xc8] sm:$0xf] %vm620, %v699
        %733 = vst.msk [vmem:[%s710 + $0xd0] sm:$0xf] %vm620, %v700
        %734 = vst.msk [vmem:[%s710 + $0xd8] sm:$0xf] %vm620, %v701
        %735 = vst.msk [vmem:[%s710 + $0xf0] sm:$0xf] %vm620, %v702
        %736 = vst.msk [vmem:[%s710 + $0xf8] sm:$0xf] %vm620, %v703
        %737 = vst.msk [vmem:[%s710 + $0x100] sm:$0xf] %vm620, %v704
        %738 = vst.msk [vmem:[%s710 + $0x108] sm:$0xf] %vm620, %v705
        %739 = vst.msk [vmem:[%s710 + $0x110] sm:$0xf] %vm620, %v706
        %740 = vst.msk [vmem:[%s710 + $0x118] sm:$0xf] %vm620, %v707
        %741 = vst.msk [vmem:[%s710 + $0x120] sm:$0xf] %vm620, %v708
        %742 = vst.msk [vmem:[%s710 + $0x128] sm:$0xf] %vm620, %v709
        %v743 = vld [vmem:[#allocation2] sm:$0xf]
        %v744 = vld [vmem:[#allocation2 + $0x4] sm:$0xf]
        %v745 = vld [vmem:[#allocation2 + $0x8] sm:$0xf]
        %v746 = vld [vmem:[#allocation2 + $0xc] sm:$0xf]
        %v747 = vld [vmem:[#allocation2 + $0x10] sm:$0xf]
        %v748 = vld [vmem:[#allocation2 + $0x14] sm:$0xf]
        %v749 = vld [vmem:[#allocation2 + $0x18] sm:$0xf]
        %v750 = vld [vmem:[#allocation2 + $0x1c] sm:$0xf]
        %v751 = vld [vmem:[#allocation2 + $0x20] sm:$0xf]
        %v752 = vld [vmem:[#allocation2 + $0x24] sm:$0xf]
        %v753 = vld [vmem:[#allocation2 + $0x28] sm:$0xf]
        %v754 = vld [vmem:[#allocation2 + $0x2c] sm:$0xf]
        %v755 = vld [vmem:[#allocation2 + $0x30] sm:$0xf]
        %v756 = vld [vmem:[#allocation2 + $0x34] sm:$0xf]
        %v757 = vld [vmem:[#allocation2 + $0x38] sm:$0xf]
        %v758 = vld [vmem:[#allocation2 + $0x3c] sm:$0xf]
        %v759 = vld [vmem:[#allocation2 + $0x50] sm:$0xf]
        %v760 = vld [vmem:[#allocation2 + $0x54] sm:$0xf]
        %v761 = vld [vmem:[#allocation2 + $0x58] sm:$0xf]
        %v762 = vld [vmem:[#allocation2 + $0x5c] sm:$0xf]
        %v763 = vld [vmem:[#allocation2 + $0x60] sm:$0xf]
        %v764 = vld [vmem:[#allocation2 + $0x64] sm:$0xf]
        %v765 = vld [vmem:[#allocation2 + $0x68] sm:$0xf]
        %v766 = vld [vmem:[#allocation2 + $0x6c] sm:$0xf]
        %v767 = vld [vmem:[#allocation2 + $0x70] sm:$0xf]
        %v768 = vld [vmem:[#allocation2 + $0x74] sm:$0xf]
        %v769 = vld [vmem:[#allocation2 + $0x78] sm:$0xf]
        %v770 = vld [vmem:[#allocation2 + $0x7c] sm:$0xf]
        %v771 = vld [vmem:[#allocation2 + $0x80] sm:$0xf]
        %v772 = vld [vmem:[#allocation2 + $0x84] sm:$0xf]
        %v773 = vld [vmem:[#allocation2 + $0x88] sm:$0xf]
        %v774 = vld [vmem:[#allocation2 + $0x8c] sm:$0xf]
        %v775 = vld [vmem:[#allocation2 + $0xa0] sm:$0xf]
        %v776 = vld [vmem:[#allocation2 + $0xa4] sm:$0xf]
        %v777 = vld [vmem:[#allocation2 + $0xa8] sm:$0xf]
        %v778 = vld [vmem:[#allocation2 + $0xac] sm:$0xf]
        %v779 = vld [vmem:[#allocation2 + $0xb0] sm:$0xf]
        %v780 = vld [vmem:[#allocation2 + $0xb4] sm:$0xf]
        %v781 = vld [vmem:[#allocation2 + $0xb8] sm:$0xf]
        %v782 = vld [vmem:[#allocation2 + $0xbc] sm:$0xf]
        %v783 = vld [vmem:[#allocation2 + $0xc0] sm:$0xf]
        %v784 = vld [vmem:[#allocation2 + $0xc4] sm:$0xf]
        %v785 = vld [vmem:[#allocation2 + $0xc8] sm:$0xf]
        %v786 = vld [vmem:[#allocation2 + $0xcc] sm:$0xf]
        %v787 = vld [vmem:[#allocation2 + $0xd0] sm:$0xf]
        %v788 = vld [vmem:[#allocation2 + $0xd4] sm:$0xf]
        %v789 = vld [vmem:[#allocation2 + $0xd8] sm:$0xf]
        %v790 = vld [vmem:[#allocation2 + $0xdc] sm:$0xf]
        %v791 = vld [vmem:[#allocation2 + $0xf0] sm:$0xf]
        %v792 = vld [vmem:[#allocation2 + $0xf4] sm:$0xf]
        %v793 = vld [vmem:[#allocation2 + $0xf8] sm:$0xf]
        %v794 = vld [vmem:[#allocation2 + $0xfc] sm:$0xf]
        %v795 = vld [vmem:[#allocation2 + $0x100] sm:$0xf]
        %v796 = vld [vmem:[#allocation2 + $0x104] sm:$0xf]
        %v797 = vld [vmem:[#allocation2 + $0x108] sm:$0xf]
        %v798 = vld [vmem:[#allocation2 + $0x10c] sm:$0xf]
        %v799 = vld [vmem:[#allocation2 + $0x110] sm:$0xf]
        %v800 = vld [vmem:[#allocation2 + $0x114] sm:$0xf]
        %v801 = vld [vmem:[#allocation2 + $0x118] sm:$0xf]
        %v802 = vld [vmem:[#allocation2 + $0x11c] sm:$0xf]
        %v803 = vld [vmem:[#allocation2 + $0x120] sm:$0xf]
        %v804 = vld [vmem:[#allocation2 + $0x124] sm:$0xf]
        %v805 = vld [vmem:[#allocation2 + $0x128] sm:$0xf]
        %v806 = vld [vmem:[#allocation2 + $0x12c] sm:$0xf]
        %v807 = vld [vmem:[%s710] sm:$0xf]
        %v808 = vld [vmem:[%s710 + $0x4] sm:$0xf]
        %v809 = vld [vmem:[%s710 + $0x8] sm:$0xf]
        %v810 = vld [vmem:[%s710 + $0xc] sm:$0xf]
        %v811 = vld [vmem:[%s710 + $0x10] sm:$0xf]
        %v812 = vld [vmem:[%s710 + $0x14] sm:$0xf]
        %v813 = vld [vmem:[%s710 + $0x18] sm:$0xf]
        %v814 = vld [vmem:[%s710 + $0x1c] sm:$0xf]
        %v815 = vld [vmem:[%s710 + $0x20] sm:$0xf]
        %v816 = vld [vmem:[%s710 + $0x24] sm:$0xf]
        %v817 = vld [vmem:[%s710 + $0x28] sm:$0xf]
        %v818 = vld [vmem:[%s710 + $0x2c] sm:$0xf]
        %v819 = vld [vmem:[%s710 + $0x30] sm:$0xf]
        %v820 = vld [vmem:[%s710 + $0x34] sm:$0xf]
        %v821 = vld [vmem:[%s710 + $0x38] sm:$0xf]
        %v822 = vld [vmem:[%s710 + $0x3c] sm:$0xf]
        %v823 = vld [vmem:[%s710 + $0x50] sm:$0xf]
        %v824 = vld [vmem:[%s710 + $0x54] sm:$0xf]
        %v825 = vld [vmem:[%s710 + $0x58] sm:$0xf]
        %v826 = vld [vmem:[%s710 + $0x5c] sm:$0xf]
        %v827 = vld [vmem:[%s710 + $0x60] sm:$0xf]
        %v828 = vld [vmem:[%s710 + $0x64] sm:$0xf]
        %v829 = vld [vmem:[%s710 + $0x68] sm:$0xf]
        %v830 = vld [vmem:[%s710 + $0x6c] sm:$0xf]
        %v831 = vld [vmem:[%s710 + $0x70] sm:$0xf]
        %v832 = vld [vmem:[%s710 + $0x74] sm:$0xf]
        %v833 = vld [vmem:[%s710 + $0x78] sm:$0xf]
        %v834 = vld [vmem:[%s710 + $0x7c] sm:$0xf]
        %v835 = vld [vmem:[%s710 + $0x80] sm:$0xf]
        %v836 = vld [vmem:[%s710 + $0x84] sm:$0xf]
        %v837 = vld [vmem:[%s710 + $0x88] sm:$0xf]
        %v838 = vld [vmem:[%s710 + $0x8c] sm:$0xf]
        %v839 = vld [vmem:[%s710 + $0xa0] sm:$0xf]
        %v840 = vld [vmem:[%s710 + $0xa4] sm:$0xf]
        %v841 = vld [vmem:[%s710 + $0xa8] sm:$0xf]
        %v842 = vld [vmem:[%s710 + $0xac] sm:$0xf]
        %v843 = vld [vmem:[%s710 + $0xb0] sm:$0xf]
        %v844 = vld [vmem:[%s710 + $0xb4] sm:$0xf]
        %v845 = vld [vmem:[%s710 + $0xb8] sm:$0xf]
        %v846 = vld [vmem:[%s710 + $0xbc] sm:$0xf]
        %v847 = vld [vmem:[%s710 + $0xc0] sm:$0xf]
        %v848 = vld [vmem:[%s710 + $0xc4] sm:$0xf]
        %v849 = vld [vmem:[%s710 + $0xc8] sm:$0xf]
        %v850 = vld [vmem:[%s710 + $0xcc] sm:$0xf]
        %v851 = vld [vmem:[%s710 + $0xd0] sm:$0xf]
        %v852 = vld [vmem:[%s710 + $0xd4] sm:$0xf]
        %v853 = vld [vmem:[%s710 + $0xd8] sm:$0xf]
        %v854 = vld [vmem:[%s710 + $0xdc] sm:$0xf]
        %v855 = vld [vmem:[%s710 + $0xf0] sm:$0xf]
        %v856 = vld [vmem:[%s710 + $0xf4] sm:$0xf]
        %v857 = vld [vmem:[%s710 + $0xf8] sm:$0xf]
        %v858 = vld [vmem:[%s710 + $0xfc] sm:$0xf]
        %v859 = vld [vmem:[%s710 + $0x100] sm:$0xf]
        %v860 = vld [vmem:[%s710 + $0x104] sm:$0xf]
        %v861 = vld [vmem:[%s710 + $0x108] sm:$0xf]
        %v862 = vld [vmem:[%s710 + $0x10c] sm:$0xf]
        %v863 = vld [vmem:[%s710 + $0x110] sm:$0xf]
        %v864 = vld [vmem:[%s710 + $0x114] sm:$0xf]
        %v865 = vld [vmem:[%s710 + $0x118] sm:$0xf]
        %v866 = vld [vmem:[%s710 + $0x11c] sm:$0xf]
        %v867 = vld [vmem:[%s710 + $0x120] sm:$0xf]
        %v868 = vld [vmem:[%s710 + $0x124] sm:$0xf]
        %v869 = vld [vmem:[%s710 + $0x128] sm:$0xf]
        %v870 = vld [vmem:[%s710 + $0x12c] sm:$0xf]
        %s871 = scalar_lea.vmem [#allocation2], 16
        %v872 = vld [vmem:[%s871] sm:$0xf]
        %v873 = vld [vmem:[%s871 + $0x4] sm:$0xf]
        %v874 = vld [vmem:[%s871 + $0x8] sm:$0xf]
        %v875 = vld [vmem:[%s871 + $0xc] sm:$0xf]
        %v876 = vld [vmem:[%s871 + $0x10] sm:$0xf]
        %v877 = vld [vmem:[%s871 + $0x14] sm:$0xf]
        %v878 = vld [vmem:[%s871 + $0x18] sm:$0xf]
        %v879 = vld [vmem:[%s871 + $0x1c] sm:$0xf]
        %v880 = vld [vmem:[%s871 + $0x20] sm:$0xf]
        %v881 = vld [vmem:[%s871 + $0x24] sm:$0xf]
        %v882 = vld [vmem:[%s871 + $0x28] sm:$0xf]
        %v883 = vld [vmem:[%s871 + $0x2c] sm:$0xf]
        %v884 = vld [vmem:[%s871 + $0x30] sm:$0xf]
        %v885 = vld [vmem:[%s871 + $0x34] sm:$0xf]
        %v886 = vld [vmem:[%s871 + $0x38] sm:$0xf]
        %v887 = vld [vmem:[%s871 + $0x3c] sm:$0xf]
        %v888 = vld [vmem:[%s871 + $0x50] sm:$0xf]
        %v889 = vld [vmem:[%s871 + $0x54] sm:$0xf]
        %v890 = vld [vmem:[%s871 + $0x58] sm:$0xf]
        %v891 = vld [vmem:[%s871 + $0x5c] sm:$0xf]
        %v892 = vld [vmem:[%s871 + $0x60] sm:$0xf]
        %v893 = vld [vmem:[%s871 + $0x64] sm:$0xf]
        %v894 = vld [vmem:[%s871 + $0x68] sm:$0xf]
        %v895 = vld [vmem:[%s871 + $0x6c] sm:$0xf]
        %v896 = vld [vmem:[%s871 + $0x70] sm:$0xf]
        %v897 = vld [vmem:[%s871 + $0x74] sm:$0xf]
        %v898 = vld [vmem:[%s871 + $0x78] sm:$0xf]
        %v899 = vld [vmem:[%s871 + $0x7c] sm:$0xf]
        %v900 = vld [vmem:[%s871 + $0x80] sm:$0xf]
        %v901 = vld [vmem:[%s871 + $0x84] sm:$0xf]
        %v902 = vld [vmem:[%s871 + $0x88] sm:$0xf]
        %v903 = vld [vmem:[%s871 + $0x8c] sm:$0xf]
        %v904 = vld [vmem:[%s871 + $0xa0] sm:$0xf]
        %v905 = vld [vmem:[%s871 + $0xa4] sm:$0xf]
        %v906 = vld [vmem:[%s871 + $0xa8] sm:$0xf]
        %v907 = vld [vmem:[%s871 + $0xac] sm:$0xf]
        %v908 = vld [vmem:[%s871 + $0xb0] sm:$0xf]
        %v909 = vld [vmem:[%s871 + $0xb4] sm:$0xf]
        %v910 = vld [vmem:[%s871 + $0xb8] sm:$0xf]
        %v911 = vld [vmem:[%s871 + $0xbc] sm:$0xf]
        %v912 = vld [vmem:[%s871 + $0xc0] sm:$0xf]
        %v913 = vld [vmem:[%s871 + $0xc4] sm:$0xf]
        %v914 = vld [vmem:[%s871 + $0xc8] sm:$0xf]
        %v915 = vld [vmem:[%s871 + $0xcc] sm:$0xf]
        %v916 = vld [vmem:[%s871 + $0xd0] sm:$0xf]
        %v917 = vld [vmem:[%s871 + $0xd4] sm:$0xf]
        %v918 = vld [vmem:[%s871 + $0xd8] sm:$0xf]
        %v919 = vld [vmem:[%s871 + $0xdc] sm:$0xf]
        %v920 = vld [vmem:[%s871 + $0xf0] sm:$0xf]
        %v921 = vld [vmem:[%s871 + $0xf4] sm:$0xf]
        %v922 = vld [vmem:[%s871 + $0xf8] sm:$0xf]
        %v923 = vld [vmem:[%s871 + $0xfc] sm:$0xf]
        %v924 = vld [vmem:[%s871 + $0x100] sm:$0xf]
        %v925 = vld [vmem:[%s871 + $0x104] sm:$0xf]
        %v926 = vld [vmem:[%s871 + $0x108] sm:$0xf]
        %v927 = vld [vmem:[%s871 + $0x10c] sm:$0xf]
        %v928 = vld [vmem:[%s871 + $0x110] sm:$0xf]
        %v929 = vld [vmem:[%s871 + $0x114] sm:$0xf]
        %v930 = vld [vmem:[%s871 + $0x118] sm:$0xf]
        %v931 = vld [vmem:[%s871 + $0x11c] sm:$0xf]
        %v932 = vld [vmem:[%s871 + $0x120] sm:$0xf]
        %v933 = vld [vmem:[%s871 + $0x124] sm:$0xf]
        %v934 = vld [vmem:[%s871 + $0x128] sm:$0xf]
        %v935 = vld [vmem:[%s871 + $0x12c] sm:$0xf]
        %v1000 = vunpack.c.l.b16 %v743
        %v1001 = vunpack.c.l.b16 %v744
        %v1002 = vunpack.c.l.b16 %v745
        %v1003 = vunpack.c.l.b16 %v746
        %v1004 = vunpack.c.l.b16 %v747
        %v1005 = vunpack.c.l.b16 %v748
        %v1006 = vunpack.c.l.b16 %v749
        %v1007 = vunpack.c.l.b16 %v750
        %v1008 = vunpack.c.l.b16 %v751
        %v1009 = vunpack.c.l.b16 %v752
        %v1010 = vunpack.c.l.b16 %v753
        %v1011 = vunpack.c.l.b16 %v754
        %v1012 = vunpack.c.l.b16 %v755
        %v1013 = vunpack.c.l.b16 %v756
        %v1014 = vunpack.c.l.b16 %v757
        %v1015 = vunpack.c.l.b16 %v758
        %v1016 = vunpack.c.l.b16 %v759
        %v1017 = vunpack.c.l.b16 %v760
        %v1018 = vunpack.c.l.b16 %v761
        %v1019 = vunpack.c.l.b16 %v762
        %v1020 = vunpack.c.l.b16 %v763
        %v1021 = vunpack.c.l.b16 %v764
        %v1022 = vunpack.c.l.b16 %v765
        %v1023 = vunpack.c.l.b16 %v766
        %v1024 = vunpack.c.l.b16 %v767
        %v1025 = vunpack.c.l.b16 %v768
        %v1026 = vunpack.c.l.b16 %v769
        %v1027 = vunpack.c.l.b16 %v770
        %v1028 = vunpack.c.l.b16 %v771
        %v1029 = vunpack.c.l.b16 %v772
        %v1030 = vunpack.c.l.b16 %v773
        %v1031 = vunpack.c.l.b16 %v774
        %v1032 = vunpack.c.l.b16 %v775
        %v1033 = vunpack.c.l.b16 %v776
        %v1034 = vunpack.c.l.b16 %v777
        %v1035 = vunpack.c.l.b16 %v778
        %v1036 = vunpack.c.l.b16 %v779
        %v1037 = vunpack.c.l.b16 %v780
        %v1038 = vunpack.c.l.b16 %v781
        %v1039 = vunpack.c.l.b16 %v782
        %v1040 = vunpack.c.l.b16 %v783
        %v1041 = vunpack.c.l.b16 %v784
        %v1042 = vunpack.c.l.b16 %v785
        %v1043 = vunpack.c.l.b16 %v786
        %v1044 = vunpack.c.l.b16 %v787
        %v1045 = vunpack.c.l.b16 %v788
        %v1046 = vunpack.c.l.b16 %v789
        %v1047 = vunpack.c.l.b16 %v790
        %v1048 = vunpack.c.l.b16 %v791
        %v1049 = vunpack.c.l.b16 %v792
        %v1050 = vunpack.c.l.b16 %v793
        %v1051 = vunpack.c.l.b16 %v794
        %v1052 = vunpack.c.l.b16 %v795
        %v1053 = vunpack.c.l.b16 %v796
        %v1054 = vunpack.c.l.b16 %v797
        %v1055 = vunpack.c.l.b16 %v798
        %v1056 = vunpack.c.l.b16 %v799
        %v1057 = vunpack.c.l.b16 %v800
        %v1058 = vunpack.c.l.b16 %v801
        %v1059 = vunpack.c.l.b16 %v802
        %v1060 = vunpack.c.l.b16 %v803
        %v1061 = vunpack.c.l.b16 %v804
        %v1062 = vunpack.c.l.b16 %v805
        %v1063 = vunpack.c.l.b16 %v806
        %v1064 = vpack.c.b16 %v1001, %v1000
        %v1065 = vpack.c.b16 %v1003, %v1002
        %v1066 = vpack.c.b16 %v1005, %v1004
        %v1067 = vpack.c.b16 %v1007, %v1006
        %v1068 = vpack.c.b16 %v1009, %v1008
        %v1069 = vpack.c.b16 %v1011, %v1010
        %v1070 = vpack.c.b16 %v1013, %v1012
        %v1071 = vpack.c.b16 %v1015, %v1014
        %v1072 = vpack.c.b16 %v1017, %v1016
        %v1073 = vpack.c.b16 %v1019, %v1018
        %v1074 = vpack.c.b16 %v1021, %v1020
        %v1075 = vpack.c.b16 %v1023, %v1022
        %v1076 = vpack.c.b16 %v1025, %v1024
        %v1077 = vpack.c.b16 %v1027, %v1026
        %v1078 = vpack.c.b16 %v1029, %v1028
        %v1079 = vpack.c.b16 %v1031, %v1030
        %v1080 = vpack.c.b16 %v1033, %v1032
        %v1081 = vpack.c.b16 %v1035, %v1034
        %v1082 = vpack.c.b16 %v1037, %v1036
        %v1083 = vpack.c.b16 %v1039, %v1038
        %v1084 = vpack.c.b16 %v1041, %v1040
        %v1085 = vpack.c.b16 %v1043, %v1042
        %v1086 = vpack.c.b16 %v1045, %v1044
        %v1087 = vpack.c.b16 %v1047, %v1046
        %v1088 = vpack.c.b16 %v1049, %v1048
        %v1089 = vpack.c.b16 %v1051, %v1050
        %v1090 = vpack.c.b16 %v1053, %v1052
        %v1091 = vpack.c.b16 %v1055, %v1054
        %v1092 = vpack.c.b16 %v1057, %v1056
        %v1093 = vpack.c.b16 %v1059, %v1058
        %v1094 = vpack.c.b16 %v1061, %v1060
        %v1095 = vpack.c.b16 %v1063, %v1062
        %v1160 = vunpack.c.l.b16 %v807
        %v1161 = vunpack.c.l.b16 %v808
        %v1162 = vunpack.c.l.b16 %v809
        %v1163 = vunpack.c.l.b16 %v810
        %v1164 = vunpack.c.l.b16 %v811
        %v1165 = vunpack.c.l.b16 %v812
        %v1166 = vunpack.c.l.b16 %v813
        %v1167 = vunpack.c.l.b16 %v814
        %v1168 = vunpack.c.l.b16 %v815
        %v1169 = vunpack.c.l.b16 %v816
        %v1170 = vunpack.c.l.b16 %v817
        %v1171 = vunpack.c.l.b16 %v818
        %v1172 = vunpack.c.l.b16 %v819
        %v1173 = vunpack.c.l.b16 %v820
        %v1174 = vunpack.c.l.b16 %v821
        %v1175 = vunpack.c.l.b16 %v822
        %v1176 = vunpack.c.l.b16 %v823
        %v1177 = vunpack.c.l.b16 %v824
        %v1178 = vunpack.c.l.b16 %v825
        %v1179 = vunpack.c.l.b16 %v826
        %v1180 = vunpack.c.l.b16 %v827
        %v1181 = vunpack.c.l.b16 %v828
        %v1182 = vunpack.c.l.b16 %v829
        %v1183 = vunpack.c.l.b16 %v830
        %v1184 = vunpack.c.l.b16 %v831
        %v1185 = vunpack.c.l.b16 %v832
        %v1186 = vunpack.c.l.b16 %v833
        %v1187 = vunpack.c.l.b16 %v834
        %v1188 = vunpack.c.l.b16 %v835
        %v1189 = vunpack.c.l.b16 %v836
        %v1190 = vunpack.c.l.b16 %v837
        %v1191 = vunpack.c.l.b16 %v838
        %v1192 = vunpack.c.l.b16 %v839
        %v1193 = vunpack.c.l.b16 %v840
        %v1194 = vunpack.c.l.b16 %v841
        %v1195 = vunpack.c.l.b16 %v842
        %v1196 = vunpack.c.l.b16 %v843
        %v1197 = vunpack.c.l.b16 %v844
        %v1198 = vunpack.c.l.b16 %v845
        %v1199 = vunpack.c.l.b16 %v846
        %v1200 = vunpack.c.l.b16 %v847
        %v1201 = vunpack.c.l.b16 %v848
        %v1202 = vunpack.c.l.b16 %v849
        %v1203 = vunpack.c.l.b16 %v850
        %v1204 = vunpack.c.l.b16 %v851
        %v1205 = vunpack.c.l.b16 %v852
        %v1206 = vunpack.c.l.b16 %v853
        %v1207 = vunpack.c.l.b16 %v854
        %v1208 = vunpack.c.l.b16 %v855
        %v1209 = vunpack.c.l.b16 %v856
        %v1210 = vunpack.c.l.b16 %v857
        %v1211 = vunpack.c.l.b16 %v858
        %v1212 = vunpack.c.l.b16 %v859
        %v1213 = vunpack.c.l.b16 %v860
        %v1214 = vunpack.c.l.b16 %v861
        %v1215 = vunpack.c.l.b16 %v862
        %v1216 = vunpack.c.l.b16 %v863
        %v1217 = vunpack.c.l.b16 %v864
        %v1218 = vunpack.c.l.b16 %v865
        %v1219 = vunpack.c.l.b16 %v866
        %v1220 = vunpack.c.l.b16 %v867
        %v1221 = vunpack.c.l.b16 %v868
        %v1222 = vunpack.c.l.b16 %v869
        %v1223 = vunpack.c.l.b16 %v870
        %v1224 = vpack.c.b16 %v1161, %v1160
        %v1225 = vpack.c.b16 %v1163, %v1162
        %v1226 = vpack.c.b16 %v1165, %v1164
        %v1227 = vpack.c.b16 %v1167, %v1166
        %v1228 = vpack.c.b16 %v1169, %v1168
        %v1229 = vpack.c.b16 %v1171, %v1170
        %v1230 = vpack.c.b16 %v1173, %v1172
        %v1231 = vpack.c.b16 %v1175, %v1174
        %v1232 = vpack.c.b16 %v1177, %v1176
        %v1233 = vpack.c.b16 %v1179, %v1178
        %v1234 = vpack.c.b16 %v1181, %v1180
        %v1235 = vpack.c.b16 %v1183, %v1182
        %v1236 = vpack.c.b16 %v1185, %v1184
        %v1237 = vpack.c.b16 %v1187, %v1186
        %v1238 = vpack.c.b16 %v1189, %v1188
        %v1239 = vpack.c.b16 %v1191, %v1190
        %v1240 = vpack.c.b16 %v1193, %v1192
        %v1241 = vpack.c.b16 %v1195, %v1194
        %v1242 = vpack.c.b16 %v1197, %v1196
        %v1243 = vpack.c.b16 %v1199, %v1198
        %v1244 = vpack.c.b16 %v1201, %v1200
        %v1245 = vpack.c.b16 %v1203, %v1202
        %v1246 = vpack.c.b16 %v1205, %v1204
        %v1247 = vpack.c.b16 %v1207, %v1206
        %v1248 = vpack.c.b16 %v1209, %v1208
        %v1249 = vpack.c.b16 %v1211, %v1210
        %v1250 = vpack.c.b16 %v1213, %v1212
        %v1251 = vpack.c.b16 %v1215, %v1214
        %v1252 = vpack.c.b16 %v1217, %v1216
        %v1253 = vpack.c.b16 %v1219, %v1218
        %v1254 = vpack.c.b16 %v1221, %v1220
        %v1255 = vpack.c.b16 %v1223, %v1222
        %1256 = vrot.lane.b32.xlu0 %v1224, 32
        %v1257 = vpop.permute.xlu0 %1256
        %1258 = vrot.lane.b32.xlu0 %v1225, 32
        %v1259 = vpop.permute.xlu0 %1258
        %1260 = vrot.lane.b32.xlu0 %v1226, 32
        %v1261 = vpop.permute.xlu0 %1260
        %1262 = vrot.lane.b32.xlu0 %v1227, 32
        %v1263 = vpop.permute.xlu0 %1262
        %1264 = vrot.lane.b32.xlu0 %v1228, 32
        %v1265 = vpop.permute.xlu0 %1264
        %1266 = vrot.lane.b32.xlu0 %v1229, 32
        %v1267 = vpop.permute.xlu0 %1266
        %1268 = vrot.lane.b32.xlu0 %v1230, 32
        %v1269 = vpop.permute.xlu0 %1268
        %1270 = vrot.lane.b32.xlu0 %v1231, 32
        %v1271 = vpop.permute.xlu0 %1270
        %1272 = vrot.lane.b32.xlu0 %v1232, 32
        %v1273 = vpop.permute.xlu0 %1272
        %1274 = vrot.lane.b32.xlu0 %v1233, 32
        %v1275 = vpop.permute.xlu0 %1274
        %1276 = vrot.lane.b32.xlu0 %v1234, 32
        %v1277 = vpop.permute.xlu0 %1276
        %1278 = vrot.lane.b32.xlu0 %v1235, 32
        %v1279 = vpop.permute.xlu0 %1278
        %1280 = vrot.lane.b32.xlu0 %v1236, 32
        %v1281 = vpop.permute.xlu0 %1280
        %1282 = vrot.lane.b32.xlu0 %v1237, 32
        %v1283 = vpop.permute.xlu0 %1282
        %1284 = vrot.lane.b32.xlu0 %v1238, 32
        %v1285 = vpop.permute.xlu0 %1284
        %1286 = vrot.lane.b32.xlu0 %v1239, 32
        %v1287 = vpop.permute.xlu0 %1286
        %1288 = vrot.lane.b32.xlu0 %v1240, 32
        %v1289 = vpop.permute.xlu0 %1288
        %1290 = vrot.lane.b32.xlu0 %v1241, 32
        %v1291 = vpop.permute.xlu0 %1290
        %1292 = vrot.lane.b32.xlu0 %v1242, 32
        %v1293 = vpop.permute.xlu0 %1292
        %1294 = vrot.lane.b32.xlu0 %v1243, 32
        %v1295 = vpop.permute.xlu0 %1294
        %1296 = vrot.lane.b32.xlu0 %v1244, 32
        %v1297 = vpop.permute.xlu0 %1296
        %1298 = vrot.lane.b32.xlu0 %v1245, 32
        %v1299 = vpop.permute.xlu0 %1298
        %1300 = vrot.lane.b32.xlu0 %v1246, 32
        %v1301 = vpop.permute.xlu0 %1300
        %1302 = vrot.lane.b32.xlu0 %v1247, 32
        %v1303 = vpop.permute.xlu0 %1302
        %1304 = vrot.lane.b32.xlu0 %v1248, 32
        %v1305 = vpop.permute.xlu0 %1304
        %1306 = vrot.lane.b32.xlu0 %v1249, 32
        %v1307 = vpop.permute.xlu0 %1306
        %1308 = vrot.lane.b32.xlu0 %v1250, 32
        %v1309 = vpop.permute.xlu0 %1308
        %1310 = vrot.lane.b32.xlu0 %v1251, 32
        %v1311 = vpop.permute.xlu0 %1310
        %1312 = vrot.lane.b32.xlu0 %v1252, 32
        %v1313 = vpop.permute.xlu0 %1312
        %1314 = vrot.lane.b32.xlu0 %v1253, 32
        %v1315 = vpop.permute.xlu0 %1314
        %1316 = vrot.lane.b32.xlu0 %v1254, 32
        %v1317 = vpop.permute.xlu0 %1316
        %1318 = vrot.lane.b32.xlu0 %v1255, 32
        %v1319 = vpop.permute.xlu0 %1318
        %v1384 = vunpack.c.l.b16 %v872
        %v1385 = vunpack.c.l.b16 %v873
        %v1386 = vunpack.c.l.b16 %v874
        %v1387 = vunpack.c.l.b16 %v875
        %v1388 = vunpack.c.l.b16 %v876
        %v1389 = vunpack.c.l.b16 %v877
        %v1390 = vunpack.c.l.b16 %v878
        %v1391 = vunpack.c.l.b16 %v879
        %v1392 = vunpack.c.l.b16 %v880
        %v1393 = vunpack.c.l.b16 %v881
        %v1394 = vunpack.c.l.b16 %v882
        %v1395 = vunpack.c.l.b16 %v883
        %v1396 = vunpack.c.l.b16 %v884
        %v1397 = vunpack.c.l.b16 %v885
        %v1398 = vunpack.c.l.b16 %v886
        %v1399 = vunpack.c.l.b16 %v887
        %v1400 = vunpack.c.l.b16 %v888
        %v1401 = vunpack.c.l.b16 %v889
        %v1402 = vunpack.c.l.b16 %v890
        %v1403 = vunpack.c.l.b16 %v891
        %v1404 = vunpack.c.l.b16 %v892
        %v1405 = vunpack.c.l.b16 %v893
        %v1406 = vunpack.c.l.b16 %v894
        %v1407 = vunpack.c.l.b16 %v895
        %v1408 = vunpack.c.l.b16 %v896
        %v1409 = vunpack.c.l.b16 %v897
        %v1410 = vunpack.c.l.b16 %v898
        %v1411 = vunpack.c.l.b16 %v899
        %v1412 = vunpack.c.l.b16 %v900
        %v1413 = vunpack.c.l.b16 %v901
        %v1414 = vunpack.c.l.b16 %v902
        %v1415 = vunpack.c.l.b16 %v903
        %v1416 = vunpack.c.l.b16 %v904
        %v1417 = vunpack.c.l.b16 %v905
        %v1418 = vunpack.c.l.b16 %v906
        %v1419 = vunpack.c.l.b16 %v907
        %v1420 = vunpack.c.l.b16 %v908
        %v1421 = vunpack.c.l.b16 %v909
        %v1422 = vunpack.c.l.b16 %v910
        %v1423 = vunpack.c.l.b16 %v911
        %v1424 = vunpack.c.l.b16 %v912
        %v1425 = vunpack.c.l.b16 %v913
        %v1426 = vunpack.c.l.b16 %v914
        %v1427 = vunpack.c.l.b16 %v915
        %v1428 = vunpack.c.l.b16 %v916
        %v1429 = vunpack.c.l.b16 %v917
        %v1430 = vunpack.c.l.b16 %v918
        %v1431 = vunpack.c.l.b16 %v919
        %v1432 = vunpack.c.l.b16 %v920
        %v1433 = vunpack.c.l.b16 %v921
        %v1434 = vunpack.c.l.b16 %v922
        %v1435 = vunpack.c.l.b16 %v923
        %v1436 = vunpack.c.l.b16 %v924
        %v1437 = vunpack.c.l.b16 %v925
        %v1438 = vunpack.c.l.b16 %v926
        %v1439 = vunpack.c.l.b16 %v927
        %v1440 = vunpack.c.l.b16 %v928
        %v1441 = vunpack.c.l.b16 %v929
        %v1442 = vunpack.c.l.b16 %v930
        %v1443 = vunpack.c.l.b16 %v931
        %v1444 = vunpack.c.l.b16 %v932
        %v1445 = vunpack.c.l.b16 %v933
        %v1446 = vunpack.c.l.b16 %v934
        %v1447 = vunpack.c.l.b16 %v935
        %v1448 = vpack.c.b16 %v1385, %v1384
        %v1449 = vpack.c.b16 %v1387, %v1386
        %v1450 = vpack.c.b16 %v1389, %v1388
        %v1451 = vpack.c.b16 %v1391, %v1390
        %v1452 = vpack.c.b16 %v1393, %v1392
        %v1453 = vpack.c.b16 %v1395, %v1394
        %v1454 = vpack.c.b16 %v1397, %v1396
        %v1455 = vpack.c.b16 %v1399, %v1398
        %v1456 = vpack.c.b16 %v1401, %v1400
        %v1457 = vpack.c.b16 %v1403, %v1402
        %v1458 = vpack.c.b16 %v1405, %v1404
        %v1459 = vpack.c.b16 %v1407, %v1406
        %v1460 = vpack.c.b16 %v1409, %v1408
        %v1461 = vpack.c.b16 %v1411, %v1410
        %v1462 = vpack.c.b16 %v1413, %v1412
        %v1463 = vpack.c.b16 %v1415, %v1414
        %v1464 = vpack.c.b16 %v1417, %v1416
        %v1465 = vpack.c.b16 %v1419, %v1418
        %v1466 = vpack.c.b16 %v1421, %v1420
        %v1467 = vpack.c.b16 %v1423, %v1422
        %v1468 = vpack.c.b16 %v1425, %v1424
        %v1469 = vpack.c.b16 %v1427, %v1426
        %v1470 = vpack.c.b16 %v1429, %v1428
        %v1471 = vpack.c.b16 %v1431, %v1430
        %v1472 = vpack.c.b16 %v1433, %v1432
        %v1473 = vpack.c.b16 %v1435, %v1434
        %v1474 = vpack.c.b16 %v1437, %v1436
        %v1475 = vpack.c.b16 %v1439, %v1438
        %v1476 = vpack.c.b16 %v1441, %v1440
        %v1477 = vpack.c.b16 %v1443, %v1442
        %v1478 = vpack.c.b16 %v1445, %v1444
        %v1479 = vpack.c.b16 %v1447, %v1446
        %1480 = vrot.lane.b32.xlu0 %v1448, 64
        %v1481 = vpop.permute.xlu0 %1480
        %1482 = vrot.lane.b32.xlu0 %v1449, 64
        %v1483 = vpop.permute.xlu0 %1482
        %1484 = vrot.lane.b32.xlu0 %v1450, 64
        %v1485 = vpop.permute.xlu0 %1484
        %1486 = vrot.lane.b32.xlu0 %v1451, 64
        %v1487 = vpop.permute.xlu0 %1486
        %1488 = vrot.lane.b32.xlu0 %v1452, 64
        %v1489 = vpop.permute.xlu0 %1488
        %1490 = vrot.lane.b32.xlu0 %v1453, 64
        %v1491 = vpop.permute.xlu0 %1490
        %1492 = vrot.lane.b32.xlu0 %v1454, 64
        %v1493 = vpop.permute.xlu0 %1492
        %1494 = vrot.lane.b32.xlu0 %v1455, 64
        %v1495 = vpop.permute.xlu0 %1494
        %1496 = vrot.lane.b32.xlu0 %v1456, 64
        %v1497 = vpop.permute.xlu0 %1496
        %1498 = vrot.lane.b32.xlu0 %v1457, 64
        %v1499 = vpop.permute.xlu0 %1498
        %1500 = vrot.lane.b32.xlu0 %v1458, 64
        %v1501 = vpop.permute.xlu0 %1500
        %1502 = vrot.lane.b32.xlu0 %v1459, 64
        %v1503 = vpop.permute.xlu0 %1502
        %1504 = vrot.lane.b32.xlu0 %v1460, 64
        %v1505 = vpop.permute.xlu0 %1504
        %1506 = vrot.lane.b32.xlu0 %v1461, 64
        %v1507 = vpop.permute.xlu0 %1506
        %1508 = vrot.lane.b32.xlu0 %v1462, 64
        %v1509 = vpop.permute.xlu0 %1508
        %1510 = vrot.lane.b32.xlu0 %v1463, 64
        %v1511 = vpop.permute.xlu0 %1510
        %1512 = vrot.lane.b32.xlu0 %v1464, 64
        %v1513 = vpop.permute.xlu0 %1512
        %1514 = vrot.lane.b32.xlu0 %v1465, 64
        %v1515 = vpop.permute.xlu0 %1514
        %1516 = vrot.lane.b32.xlu0 %v1466, 64
        %v1517 = vpop.permute.xlu0 %1516
        %1518 = vrot.lane.b32.xlu0 %v1467, 64
        %v1519 = vpop.permute.xlu0 %1518
        %1520 = vrot.lane.b32.xlu0 %v1468, 64
        %v1521 = vpop.permute.xlu0 %1520
        %1522 = vrot.lane.b32.xlu0 %v1469, 64
        %v1523 = vpop.permute.xlu0 %1522
        %1524 = vrot.lane.b32.xlu0 %v1470, 64
        %v1525 = vpop.permute.xlu0 %1524
        %1526 = vrot.lane.b32.xlu0 %v1471, 64
        %v1527 = vpop.permute.xlu0 %1526
        %1528 = vrot.lane.b32.xlu0 %v1472, 64
        %v1529 = vpop.permute.xlu0 %1528
        %1530 = vrot.lane.b32.xlu0 %v1473, 64
        %v1531 = vpop.permute.xlu0 %1530
        %1532 = vrot.lane.b32.xlu0 %v1474, 64
        %v1533 = vpop.permute.xlu0 %1532
        %1534 = vrot.lane.b32.xlu0 %v1475, 64
        %v1535 = vpop.permute.xlu0 %1534
        %1536 = vrot.lane.b32.xlu0 %v1476, 64
        %v1537 = vpop.permute.xlu0 %1536
        %1538 = vrot.lane.b32.xlu0 %v1477, 64
        %v1539 = vpop.permute.xlu0 %1538
        %1540 = vrot.lane.b32.xlu0 %v1478, 64
        %v1541 = vpop.permute.xlu0 %1540
        %1542 = vrot.lane.b32.xlu0 %v1479, 64
        %v1543 = vpop.permute.xlu0 %1542
        %vm1544 = vcmask 261120
        %v1547 = vsel %vm1544, %v1064, %v1257
        %v1550 = vsel %vm1544, %v1065, %v1259
        %v1553 = vsel %vm1544, %v1066, %v1261
        %v1556 = vsel %vm1544, %v1067, %v1263
        %v1559 = vsel %vm1544, %v1068, %v1265
        %v1562 = vsel %vm1544, %v1069, %v1267
        %v1565 = vsel %vm1544, %v1070, %v1269
        %v1568 = vsel %vm1544, %v1071, %v1271
        %v1571 = vsel %vm1544, %v1072, %v1273
        %v1574 = vsel %vm1544, %v1073, %v1275
        %v1577 = vsel %vm1544, %v1074, %v1277
        %v1580 = vsel %vm1544, %v1075, %v1279
        %v1583 = vsel %vm1544, %v1076, %v1281
        %v1586 = vsel %vm1544, %v1077, %v1283
        %v1589 = vsel %vm1544, %v1078, %v1285
        %v1592 = vsel %vm1544, %v1079, %v1287
        %v1595 = vsel %vm1544, %v1080, %v1289
        %v1598 = vsel %vm1544, %v1081, %v1291
        %v1601 = vsel %vm1544, %v1082, %v1293
        %v1604 = vsel %vm1544, %v1083, %v1295
        %v1607 = vsel %vm1544, %v1084, %v1297
        %v1610 = vsel %vm1544, %v1085, %v1299
        %v1613 = vsel %vm1544, %v1086, %v1301
        %v1616 = vsel %vm1544, %v1087, %v1303
        %v1619 = vsel %vm1544, %v1088, %v1305
        %v1622 = vsel %vm1544, %v1089, %v1307
        %v1625 = vsel %vm1544, %v1090, %v1309
        %v1628 = vsel %vm1544, %v1091, %v1311
        %v1631 = vsel %vm1544, %v1092, %v1313
        %v1634 = vsel %vm1544, %v1093, %v1315
        %v1637 = vsel %vm1544, %v1094, %v1317
        %v1640 = vsel %vm1544, %v1095, %v1319
        %vm1641 = vcmask 523264
        %v1643 = vsel %vm1641, %v1547, %v1481
        %v1645 = vsel %vm1641, %v1550, %v1483
        %v1647 = vsel %vm1641, %v1553, %v1485
        %v1649 = vsel %vm1641, %v1556, %v1487
        %v1651 = vsel %vm1641, %v1559, %v1489
        %v1653 = vsel %vm1641, %v1562, %v1491
        %v1655 = vsel %vm1641, %v1565, %v1493
        %v1657 = vsel %vm1641, %v1568, %v1495
        %v1659 = vsel %vm1641, %v1571, %v1497
        %v1661 = vsel %vm1641, %v1574, %v1499
        %v1663 = vsel %vm1641, %v1577, %v1501
        %v1665 = vsel %vm1641, %v1580, %v1503
        %v1667 = vsel %vm1641, %v1583, %v1505
        %v1669 = vsel %vm1641, %v1586, %v1507
        %v1671 = vsel %vm1641, %v1589, %v1509
        %v1673 = vsel %vm1641, %v1592, %v1511
        %v1675 = vsel %vm1641, %v1595, %v1513
        %v1677 = vsel %vm1641, %v1598, %v1515
        %v1679 = vsel %vm1641, %v1601, %v1517
        %v1681 = vsel %vm1641, %v1604, %v1519
        %v1683 = vsel %vm1641, %v1607, %v1521
        %v1685 = vsel %vm1641, %v1610, %v1523
        %v1687 = vsel %vm1641, %v1613, %v1525
        %v1689 = vsel %vm1641, %v1616, %v1527
        %v1691 = vsel %vm1641, %v1619, %v1529
        %v1693 = vsel %vm1641, %v1622, %v1531
        %v1695 = vsel %vm1641, %v1625, %v1533
        %v1697 = vsel %vm1641, %v1628, %v1535
        %v1699 = vsel %vm1641, %v1631, %v1537
        %v1701 = vsel %vm1641, %v1634, %v1539
        %v1703 = vsel %vm1641, %v1637, %v1541
        %v1705 = vsel %vm1641, %v1640, %v1543
        %v1706 = vld [vmem:[%s3] sm:$0xf]
        %v1707 = vld [vmem:[%s3 + $0x4] sm:$0xf]
        %v1708 = vld [vmem:[%s3 + $0x8] sm:$0xf]
        %v1709 = vld [vmem:[%s3 + $0xc] sm:$0xf]
        %v1710 = vld [vmem:[%s3 + $0x10] sm:$0xf]
        %v1711 = vld [vmem:[%s3 + $0x14] sm:$0xf]
        %v1712 = vld [vmem:[%s3 + $0x18] sm:$0xf]
        %v1713 = vld [vmem:[%s3 + $0x1c] sm:$0xf]
        %v1714 = vld [vmem:[%s3 + $0x20] sm:$0xf]
        %v1715 = vld [vmem:[%s3 + $0x24] sm:$0xf]
        %v1716 = vld [vmem:[%s3 + $0x28] sm:$0xf]
        %v1717 = vld [vmem:[%s3 + $0x2c] sm:$0xf]
        %v1730 = vunpack.c.l.b16 %v1706
        %v1731 = vunpack.c.l.b16 %v1707
        %v1732 = vunpack.c.l.b16 %v1708
        %v1733 = vunpack.c.l.b16 %v1709
        %v1734 = vunpack.c.l.b16 %v1710
        %v1735 = vunpack.c.l.b16 %v1711
        %v1736 = vunpack.c.l.b16 %v1712
        %v1737 = vunpack.c.l.b16 %v1713
        %v1738 = vunpack.c.l.b16 %v1714
        %v1739 = vunpack.c.l.b16 %v1715
        %v1740 = vunpack.c.l.b16 %v1716
        %v1741 = vunpack.c.l.b16 %v1717
        %v1742 = vpack.c.b16 %v1731, %v1730
        %v1743 = vpack.c.b16 %v1733, %v1732
        %v1744 = vpack.c.b16 %v1735, %v1734
        %v1745 = vpack.c.b16 %v1737, %v1736
        %v1746 = vpack.c.b16 %v1739, %v1738
        %v1747 = vpack.c.b16 %v1741, %v1740
        %vm1754 = vcmask 785408
        %v1755 = vsel %vm1754, %v1643, 0
        %v1757 = vsel %vm1754, %v1645, 0
        %v1759 = vsel %vm1754, %v1647, 0
        %v1761 = vsel %vm1754, %v1649, 0
        %v1763 = vsel %vm1754, %v1651, 0
        %v1765 = vsel %vm1754, %v1653, 0
        %v1767 = vsel %vm1754, %v1655, 0
        %v1769 = vsel %vm1754, %v1657, 0
        %v1771 = vsel %vm1754, %v1659, 0
        %v1773 = vsel %vm1754, %v1661, 0
        %v1775 = vsel %vm1754, %v1663, 0
        %v1777 = vsel %vm1754, %v1665, 0
        %v1779 = vsel %vm1754, %v1667, 0
        %v1781 = vsel %vm1754, %v1669, 0
        %v1783 = vsel %vm1754, %v1671, 0
        %v1785 = vsel %vm1754, %v1673, 0
        %v1787 = vsel %vm1754, %v1675, 0
        %v1789 = vsel %vm1754, %v1677, 0
        %v1791 = vsel %vm1754, %v1679, 0
        %v1793 = vsel %vm1754, %v1681, 0
        %v1795 = vsel %vm1754, %v1683, 0
        %v1797 = vsel %vm1754, %v1685, 0
        %v1799 = vsel %vm1754, %v1687, 0
        %v1801 = vsel %vm1754, %v1689, 0
        %v1803 = vsel %vm1754, %v1691, 0
        %v1805 = vsel %vm1754, %v1693, 0
        %v1807 = vsel %vm1754, %v1695, 0
        %v1809 = vsel %vm1754, %v1697, 0
        %v1811 = vsel %vm1754, %v1699, 0
        %v1813 = vsel %vm1754, %v1701, 0
        %v1815 = vsel %vm1754, %v1703, 0
        %v1817 = vsel %vm1754, %v1705, 0
        %1819 = vmatpush.bf16.msra.mxu0 0
        %1820 = vmatpush.bf16.msra.mxu0 0
        %1821 = vmatpush.bf16.msra.mxu0 %v1747
        %1822 = vmatpush.bf16.msra.mxu0 %v1746
        %1823 = vmatpush.bf16.msra.mxu0 %v1745
        %1824 = vmatpush.bf16.msra.mxu0 %v1744
        %1825 = vmatpush.bf16.msra.mxu0 %v1743
        %1826 = vmatpush.bf16.msra.mxu0 %v1742
        %1827 = vmatmul.bf16.gmra.mxu0 %v1755
        %v1828 = vpop.f32.mrf.mxu0
        %v1829 = vadd.f32 0.0, %v1828
        %v1830 = vpop.f32.mrf.mxu0
        %v1831 = vadd.f32 0.0, %v1830
        %1832 = vmatmul.bf16.gmra.mxu0 %v1757
        %v1833 = vpop.f32.mrf.mxu0
        %v1834 = vadd.f32 0.0, %v1833
        %v1835 = vpop.f32.mrf.mxu0
        %v1836 = vadd.f32 0.0, %v1835
        %1837 = vmatmul.bf16.gmra.mxu0 %v1759
        %v1838 = vpop.f32.mrf.mxu0
        %v1839 = vadd.f32 0.0, %v1838
        %v1840 = vpop.f32.mrf.mxu0
        %v1841 = vadd.f32 0.0, %v1840
        %1842 = vmatmul.bf16.gmra.mxu0 %v1761
        %v1843 = vpop.f32.mrf.mxu0
        %v1844 = vadd.f32 0.0, %v1843
        %v1845 = vpop.f32.mrf.mxu0
        %v1846 = vadd.f32 0.0, %v1845
        %1847 = vmatmul.bf16.gmra.mxu0 %v1763
        %v1848 = vpop.f32.mrf.mxu0
        %v1849 = vadd.f32 0.0, %v1848
        %v1850 = vpop.f32.mrf.mxu0
        %v1851 = vadd.f32 0.0, %v1850
        %1852 = vmatmul.bf16.gmra.mxu0 %v1765
        %v1853 = vpop.f32.mrf.mxu0
        %v1854 = vadd.f32 0.0, %v1853
        %v1855 = vpop.f32.mrf.mxu0
        %v1856 = vadd.f32 0.0, %v1855
        %1857 = vmatmul.bf16.gmra.mxu0 %v1767
        %v1858 = vpop.f32.mrf.mxu0
        %v1859 = vadd.f32 0.0, %v1858
        %v1860 = vpop.f32.mrf.mxu0
        %v1861 = vadd.f32 0.0, %v1860
        %1862 = vmatmul.bf16.gmra.mxu0 %v1769
        %v1863 = vpop.f32.mrf.mxu0
        %v1864 = vadd.f32 0.0, %v1863
        %v1865 = vpop.f32.mrf.mxu0
        %v1866 = vadd.f32 0.0, %v1865
        %1867 = vmatmul.bf16.gmra.mxu0 %v1771
        %v1868 = vpop.f32.mrf.mxu0
        %v1869 = vadd.f32 0.0, %v1868
        %v1870 = vpop.f32.mrf.mxu0
        %v1871 = vadd.f32 0.0, %v1870
        %1872 = vmatmul.bf16.gmra.mxu0 %v1773
        %v1873 = vpop.f32.mrf.mxu0
        %v1874 = vadd.f32 0.0, %v1873
        %v1875 = vpop.f32.mrf.mxu0
        %v1876 = vadd.f32 0.0, %v1875
        %1877 = vmatmul.bf16.gmra.mxu0 %v1775
        %v1878 = vpop.f32.mrf.mxu0
        %v1879 = vadd.f32 0.0, %v1878
        %v1880 = vpop.f32.mrf.mxu0
        %v1881 = vadd.f32 0.0, %v1880
        %1882 = vmatmul.bf16.gmra.mxu0 %v1777
        %v1883 = vpop.f32.mrf.mxu0
        %v1884 = vadd.f32 0.0, %v1883
        %v1885 = vpop.f32.mrf.mxu0
        %v1886 = vadd.f32 0.0, %v1885
        %1887 = vmatmul.bf16.gmra.mxu0 %v1779
        %v1888 = vpop.f32.mrf.mxu0
        %v1889 = vadd.f32 0.0, %v1888
        %v1890 = vpop.f32.mrf.mxu0
        %v1891 = vadd.f32 0.0, %v1890
        %1892 = vmatmul.bf16.gmra.mxu0 %v1781
        %v1893 = vpop.f32.mrf.mxu0
        %v1894 = vadd.f32 0.0, %v1893
        %v1895 = vpop.f32.mrf.mxu0
        %v1896 = vadd.f32 0.0, %v1895
        %1897 = vmatmul.bf16.gmra.mxu0 %v1783
        %v1898 = vpop.f32.mrf.mxu0
        %v1899 = vadd.f32 0.0, %v1898
        %v1900 = vpop.f32.mrf.mxu0
        %v1901 = vadd.f32 0.0, %v1900
        %1902 = vmatmul.bf16.gmra.mxu0 %v1785
        %v1903 = vpop.f32.mrf.mxu0
        %v1904 = vadd.f32 0.0, %v1903
        %v1905 = vpop.f32.mrf.mxu0
        %v1906 = vadd.f32 0.0, %v1905
        %1907 = vmatmul.bf16.gmra.mxu0 %v1787
        %v1908 = vpop.f32.mrf.mxu0
        %v1909 = vadd.f32 0.0, %v1908
        %v1910 = vpop.f32.mrf.mxu0
        %v1911 = vadd.f32 0.0, %v1910
        %1912 = vmatmul.bf16.gmra.mxu0 %v1789
        %v1913 = vpop.f32.mrf.mxu0
        %v1914 = vadd.f32 0.0, %v1913
        %v1915 = vpop.f32.mrf.mxu0
        %v1916 = vadd.f32 0.0, %v1915
        %1917 = vmatmul.bf16.gmra.mxu0 %v1791
        %v1918 = vpop.f32.mrf.mxu0
        %v1919 = vadd.f32 0.0, %v1918
        %v1920 = vpop.f32.mrf.mxu0
        %v1921 = vadd.f32 0.0, %v1920
        %1922 = vmatmul.bf16.gmra.mxu0 %v1793
        %v1923 = vpop.f32.mrf.mxu0
        %v1924 = vadd.f32 0.0, %v1923
        %v1925 = vpop.f32.mrf.mxu0
        %v1926 = vadd.f32 0.0, %v1925
        %1927 = vmatmul.bf16.gmra.mxu0 %v1795
        %v1928 = vpop.f32.mrf.mxu0
        %v1929 = vadd.f32 0.0, %v1928
        %v1930 = vpop.f32.mrf.mxu0
        %v1931 = vadd.f32 0.0, %v1930
        %1932 = vmatmul.bf16.gmra.mxu0 %v1797
        %v1933 = vpop.f32.mrf.mxu0
        %v1934 = vadd.f32 0.0, %v1933
        %v1935 = vpop.f32.mrf.mxu0
        %v1936 = vadd.f32 0.0, %v1935
        %1937 = vmatmul.bf16.gmra.mxu0 %v1799
        %v1938 = vpop.f32.mrf.mxu0
        %v1939 = vadd.f32 0.0, %v1938
        %v1940 = vpop.f32.mrf.mxu0
        %v1941 = vadd.f32 0.0, %v1940
        %1942 = vmatmul.bf16.gmra.mxu0 %v1801
        %v1943 = vpop.f32.mrf.mxu0
        %v1944 = vadd.f32 0.0, %v1943
        %v1945 = vpop.f32.mrf.mxu0
        %v1946 = vadd.f32 0.0, %v1945
        %1947 = vmatmul.bf16.gmra.mxu0 %v1803
        %v1948 = vpop.f32.mrf.mxu0
        %v1949 = vadd.f32 0.0, %v1948
        %v1950 = vpop.f32.mrf.mxu0
        %v1951 = vadd.f32 0.0, %v1950
        %1952 = vmatmul.bf16.gmra.mxu0 %v1805
        %v1953 = vpop.f32.mrf.mxu0
        %v1954 = vadd.f32 0.0, %v1953
        %v1955 = vpop.f32.mrf.mxu0
        %v1956 = vadd.f32 0.0, %v1955
        %1957 = vmatmul.bf16.gmra.mxu0 %v1807
        %v1958 = vpop.f32.mrf.mxu0
        %v1959 = vadd.f32 0.0, %v1958
        %v1960 = vpop.f32.mrf.mxu0
        %v1961 = vadd.f32 0.0, %v1960
        %1962 = vmatmul.bf16.gmra.mxu0 %v1809
        %v1963 = vpop.f32.mrf.mxu0
        %v1964 = vadd.f32 0.0, %v1963
        %v1965 = vpop.f32.mrf.mxu0
        %v1966 = vadd.f32 0.0, %v1965
        %1967 = vmatmul.bf16.gmra.mxu0 %v1811
        %v1968 = vpop.f32.mrf.mxu0
        %v1969 = vadd.f32 0.0, %v1968
        %v1970 = vpop.f32.mrf.mxu0
        %v1971 = vadd.f32 0.0, %v1970
        %1972 = vmatmul.bf16.gmra.mxu0 %v1813
        %v1973 = vpop.f32.mrf.mxu0
        %v1974 = vadd.f32 0.0, %v1973
        %v1975 = vpop.f32.mrf.mxu0
        %v1976 = vadd.f32 0.0, %v1975
        %1977 = vmatmul.bf16.gmra.mxu0 %v1815
        %v1978 = vpop.f32.mrf.mxu0
        %v1979 = vadd.f32 0.0, %v1978
        %v1980 = vpop.f32.mrf.mxu0
        %v1981 = vadd.f32 0.0, %v1980
        %1982 = vmatmul.bf16.gmra.mxu0 %v1817
        %v1983 = vpop.f32.mrf.mxu0
        %v1984 = vadd.f32 0.0, %v1983
        %v1985 = vpop.f32.mrf.mxu0
        %v1986 = vadd.f32 0.0, %v1985
        %1987 = vdwg.mxu0
        %v1988 = vrot.slane %v1829, 7
        %v1989 = vrot.slane %v1831, 7
        %v1990 = vrot.slane %v1834, 7
        %v1991 = vrot.slane %v1836, 7
        %v1992 = vrot.slane %v1839, 7
        %v1993 = vrot.slane %v1841, 7
        %v1994 = vrot.slane %v1844, 7
        %v1995 = vrot.slane %v1846, 7
        %v1996 = vrot.slane %v1849, 7
        %v1997 = vrot.slane %v1851, 7
        %v1998 = vrot.slane %v1854, 7
        %v1999 = vrot.slane %v1856, 7
        %v2000 = vrot.slane %v1859, 7
        %v2001 = vrot.slane %v1861, 7
        %v2002 = vrot.slane %v1864, 7
        %v2003 = vrot.slane %v1866, 7
        %v2004 = vrot.slane %v1869, 7
        %v2005 = vrot.slane %v1871, 7
        %v2006 = vrot.slane %v1874, 7
        %v2007 = vrot.slane %v1876, 7
        %v2008 = vrot.slane %v1879, 7
        %v2009 = vrot.slane %v1881, 7
        %v2010 = vrot.slane %v1884, 7
        %v2011 = vrot.slane %v1886, 7
        %v2012 = vrot.slane %v1889, 7
        %v2013 = vrot.slane %v1891, 7
        %v2014 = vrot.slane %v1894, 7
        %v2015 = vrot.slane %v1896, 7
        %v2016 = vrot.slane %v1899, 7
        %v2017 = vrot.slane %v1901, 7
        %v2018 = vrot.slane %v1904, 7
        %v2019 = vrot.slane %v1906, 7
        %v2020 = vrot.slane %v1909, 7
        %v2021 = vrot.slane %v1911, 7
        %v2022 = vrot.slane %v1914, 7
        %v2023 = vrot.slane %v1916, 7
        %v2024 = vrot.slane %v1919, 7
        %v2025 = vrot.slane %v1921, 7
        %v2026 = vrot.slane %v1924, 7
        %v2027 = vrot.slane %v1926, 7
        %v2028 = vrot.slane %v1929, 7
        %v2029 = vrot.slane %v1931, 7
        %v2030 = vrot.slane %v1934, 7
        %v2031 = vrot.slane %v1936, 7
        %v2032 = vrot.slane %v1939, 7
        %v2033 = vrot.slane %v1941, 7
        %v2034 = vrot.slane %v1944, 7
        %v2035 = vrot.slane %v1946, 7
        %v2036 = vrot.slane %v1949, 7
        %v2037 = vrot.slane %v1951, 7
        %v2038 = vrot.slane %v1954, 7
        %v2039 = vrot.slane %v1956, 7
        %v2040 = vrot.slane %v1959, 7
        %v2041 = vrot.slane %v1961, 7
        %v2042 = vrot.slane %v1964, 7
        %v2043 = vrot.slane %v1966, 7
        %v2044 = vrot.slane %v1969, 7
        %v2045 = vrot.slane %v1971, 7
        %v2046 = vrot.slane %v1974, 7
        %v2047 = vrot.slane %v1976, 7
        %v2048 = vrot.slane %v1979, 7
        %v2049 = vrot.slane %v1981, 7
        %v2050 = vrot.slane %v1984, 7
        %v2051 = vrot.slane %v1986, 7
        %v2052 = vlaneseq
        %v2053 = vshrl.u32 %v2052, 7
        %vm2054 = vcmp.lt.s32.totalorder %v2053, 1
        %v2055 = vsel %vm2054, %v2049, %v2050
        %v2056 = vsel %vm2054, %v2047, %v2048
        %v2057 = vsel %vm2054, %v2045, %v2046
        %v2058 = vsel %vm2054, %v2043, %v2044
        %v2059 = vsel %vm2054, %v2041, %v2042
        %v2060 = vsel %vm2054, %v2039, %v2040
        %v2061 = vsel %vm2054, %v2037, %v2038
        %v2062 = vsel %vm2054, %v2035, %v2036
        %v2063 = vsel %vm2054, %v2033, %v2034
        %v2064 = vsel %vm2054, %v2031, %v2032
        %v2065 = vsel %vm2054, %v2029, %v2030
        %v2066 = vsel %vm2054, %v2027, %v2028
        %v2067 = vsel %vm2054, %v2025, %v2026
        %v2068 = vsel %vm2054, %v2023, %v2024
        %v2069 = vsel %vm2054, %v2021, %v2022
        %v2070 = vsel %vm2054, %v2019, %v2020
        %v2071 = vsel %vm2054, %v2017, %v2018
        %v2072 = vsel %vm2054, %v2015, %v2016
        %v2073 = vsel %vm2054, %v2013, %v2014
        %v2074 = vsel %vm2054, %v2011, %v2012
        %v2075 = vsel %vm2054, %v2009, %v2010
        %v2076 = vsel %vm2054, %v2007, %v2008
        %v2077 = vsel %vm2054, %v2005, %v2006
        %v2078 = vsel %vm2054, %v2003, %v2004
        %v2079 = vsel %vm2054, %v2001, %v2002
        %v2080 = vsel %vm2054, %v1999, %v2000
        %v2081 = vsel %vm2054, %v1997, %v1998
        %v2082 = vsel %vm2054, %v1995, %v1996
        %v2083 = vsel %vm2054, %v1993, %v1994
        %v2084 = vsel %vm2054, %v1991, %v1992
        %v2085 = vsel %vm2054, %v1989, %v1990
        %v2086 = vsel %vm2054, %v2051, %v1988
        %2119 = vrot.lane.b32.xlu0 %v2086, 32
        %v2120 = vpop.permute.xlu0 %2119
        %2121 = vrot.lane.b32.xlu0 %v2085, 32
        %v2122 = vpop.permute.xlu0 %2121
        %2123 = vrot.lane.b32.xlu0 %v2084, 32
        %v2124 = vpop.permute.xlu0 %2123
        %2125 = vrot.lane.b32.xlu0 %v2083, 32
        %v2126 = vpop.permute.xlu0 %2125
        %2127 = vrot.lane.b32.xlu0 %v2082, 32
        %v2128 = vpop.permute.xlu0 %2127
        %2129 = vrot.lane.b32.xlu0 %v2081, 32
        %v2130 = vpop.permute.xlu0 %2129
        %2131 = vrot.lane.b32.xlu0 %v2080, 32
        %v2132 = vpop.permute.xlu0 %2131
        %2133 = vrot.lane.b32.xlu0 %v2079, 32
        %v2134 = vpop.permute.xlu0 %2133
        %2135 = vrot.lane.b32.xlu0 %v2078, 32
        %v2136 = vpop.permute.xlu0 %2135
        %2137 = vrot.lane.b32.xlu0 %v2077, 32
        %v2138 = vpop.permute.xlu0 %2137
        %2139 = vrot.lane.b32.xlu0 %v2076, 32
        %v2140 = vpop.permute.xlu0 %2139
        %2141 = vrot.lane.b32.xlu0 %v2075, 32
        %v2142 = vpop.permute.xlu0 %2141
        %2143 = vrot.lane.b32.xlu0 %v2074, 32
        %v2144 = vpop.permute.xlu0 %2143
        %2145 = vrot.lane.b32.xlu0 %v2073, 32
        %v2146 = vpop.permute.xlu0 %2145
        %2147 = vrot.lane.b32.xlu0 %v2072, 32
        %v2148 = vpop.permute.xlu0 %2147
        %2149 = vrot.lane.b32.xlu0 %v2071, 32
        %v2150 = vpop.permute.xlu0 %2149
        %2151 = vrot.lane.b32.xlu0 %v2070, 32
        %v2152 = vpop.permute.xlu0 %2151
        %2153 = vrot.lane.b32.xlu0 %v2069, 32
        %v2154 = vpop.permute.xlu0 %2153
        %2155 = vrot.lane.b32.xlu0 %v2068, 32
        %v2156 = vpop.permute.xlu0 %2155
        %2157 = vrot.lane.b32.xlu0 %v2067, 32
        %v2158 = vpop.permute.xlu0 %2157
        %2159 = vrot.lane.b32.xlu0 %v2066, 32
        %v2160 = vpop.permute.xlu0 %2159
        %2161 = vrot.lane.b32.xlu0 %v2065, 32
        %v2162 = vpop.permute.xlu0 %2161
        %2163 = vrot.lane.b32.xlu0 %v2064, 32
        %v2164 = vpop.permute.xlu0 %2163
        %2165 = vrot.lane.b32.xlu0 %v2063, 32
        %v2166 = vpop.permute.xlu0 %2165
        %2167 = vrot.lane.b32.xlu0 %v2062, 32
        %v2168 = vpop.permute.xlu0 %2167
        %2169 = vrot.lane.b32.xlu0 %v2061, 32
        %v2170 = vpop.permute.xlu0 %2169
        %2171 = vrot.lane.b32.xlu0 %v2060, 32
        %v2172 = vpop.permute.xlu0 %2171
        %2173 = vrot.lane.b32.xlu0 %v2059, 32
        %v2174 = vpop.permute.xlu0 %2173
        %2175 = vrot.lane.b32.xlu0 %v2058, 32
        %v2176 = vpop.permute.xlu0 %2175
        %2177 = vrot.lane.b32.xlu0 %v2057, 32
        %v2178 = vpop.permute.xlu0 %2177
        %2179 = vrot.lane.b32.xlu0 %v2056, 32
        %v2180 = vpop.permute.xlu0 %2179
        %2181 = vrot.lane.b32.xlu0 %v2055, 32
        %v2182 = vpop.permute.xlu0 %2181
        %v2215 = vadd.f32 %v1829, %v2120
        %v2216 = vadd.f32 %v1834, %v2122
        %v2217 = vadd.f32 %v1839, %v2124
        %v2218 = vadd.f32 %v1844, %v2126
        %v2219 = vadd.f32 %v1849, %v2128
        %v2220 = vadd.f32 %v1854, %v2130
        %v2221 = vadd.f32 %v1859, %v2132
        %v2222 = vadd.f32 %v1864, %v2134
        %v2223 = vadd.f32 %v1869, %v2136
        %v2224 = vadd.f32 %v1874, %v2138
        %v2225 = vadd.f32 %v1879, %v2140
        %v2226 = vadd.f32 %v1884, %v2142
        %v2227 = vadd.f32 %v1889, %v2144
        %v2228 = vadd.f32 %v1894, %v2146
        %v2229 = vadd.f32 %v1899, %v2148
        %v2230 = vadd.f32 %v1904, %v2150
        %v2231 = vadd.f32 %v1909, %v2152
        %v2232 = vadd.f32 %v1914, %v2154
        %v2233 = vadd.f32 %v1919, %v2156
        %v2234 = vadd.f32 %v1924, %v2158
        %v2235 = vadd.f32 %v1929, %v2160
        %v2236 = vadd.f32 %v1934, %v2162
        %v2237 = vadd.f32 %v1939, %v2164
        %v2238 = vadd.f32 %v1944, %v2166
        %v2239 = vadd.f32 %v1949, %v2168
        %v2240 = vadd.f32 %v1954, %v2170
        %v2241 = vadd.f32 %v1959, %v2172
        %v2242 = vadd.f32 %v1964, %v2174
        %v2243 = vadd.f32 %v1969, %v2176
        %v2244 = vadd.f32 %v1974, %v2178
        %v2245 = vadd.f32 %v1979, %v2180
        %v2246 = vadd.f32 %v1984, %v2182
        %2311 = vrot.lane.b32.xlu0 %v1829, 64
        %v2312 = vpop.permute.xlu0 %2311
        %2313 = vrot.lane.b32.xlu0 %v1831, 64
        %v2314 = vpop.permute.xlu0 %2313
        %2315 = vrot.lane.b32.xlu0 %v1834, 64
        %v2316 = vpop.permute.xlu0 %2315
        %2317 = vrot.lane.b32.xlu0 %v1836, 64
        %v2318 = vpop.permute.xlu0 %2317
        %2319 = vrot.lane.b32.xlu0 %v1839, 64
        %v2320 = vpop.permute.xlu0 %2319
        %2321 = vrot.lane.b32.xlu0 %v1841, 64
        %v2322 = vpop.permute.xlu0 %2321
        %2323 = vrot.lane.b32.xlu0 %v1844, 64
        %v2324 = vpop.permute.xlu0 %2323
        %2325 = vrot.lane.b32.xlu0 %v1846, 64
        %v2326 = vpop.permute.xlu0 %2325
        %2327 = vrot.lane.b32.xlu0 %v1849, 64
        %v2328 = vpop.permute.xlu0 %2327
        %2329 = vrot.lane.b32.xlu0 %v1851, 64
        %v2330 = vpop.permute.xlu0 %2329
        %2331 = vrot.lane.b32.xlu0 %v1854, 64
        %v2332 = vpop.permute.xlu0 %2331
        %2333 = vrot.lane.b32.xlu0 %v1856, 64
        %v2334 = vpop.permute.xlu0 %2333
        %2335 = vrot.lane.b32.xlu0 %v1859, 64
        %v2336 = vpop.permute.xlu0 %2335
        %2337 = vrot.lane.b32.xlu0 %v1861, 64
        %v2338 = vpop.permute.xlu0 %2337
        %2339 = vrot.lane.b32.xlu0 %v1864, 64
        %v2340 = vpop.permute.xlu0 %2339
        %2341 = vrot.lane.b32.xlu0 %v1866, 64
        %v2342 = vpop.permute.xlu0 %2341
        %2343 = vrot.lane.b32.xlu0 %v1869, 64
        %v2344 = vpop.permute.xlu0 %2343
        %2345 = vrot.lane.b32.xlu0 %v1871, 64
        %v2346 = vpop.permute.xlu0 %2345
        %2347 = vrot.lane.b32.xlu0 %v1874, 64
        %v2348 = vpop.permute.xlu0 %2347
        %2349 = vrot.lane.b32.xlu0 %v1876, 64
        %v2350 = vpop.permute.xlu0 %2349
        %2351 = vrot.lane.b32.xlu0 %v1879, 64
        %v2352 = vpop.permute.xlu0 %2351
        %2353 = vrot.lane.b32.xlu0 %v1881, 64
        %v2354 = vpop.permute.xlu0 %2353
        %2355 = vrot.lane.b32.xlu0 %v1884, 64
        %v2356 = vpop.permute.xlu0 %2355
        %2357 = vrot.lane.b32.xlu0 %v1886, 64
        %v2358 = vpop.permute.xlu0 %2357
        %2359 = vrot.lane.b32.xlu0 %v1889, 64
        %v2360 = vpop.permute.xlu0 %2359
        %2361 = vrot.lane.b32.xlu0 %v1891, 64
        %v2362 = vpop.permute.xlu0 %2361
        %2363 = vrot.lane.b32.xlu0 %v1894, 64
        %v2364 = vpop.permute.xlu0 %2363
        %2365 = vrot.lane.b32.xlu0 %v1896, 64
        %v2366 = vpop.permute.xlu0 %2365
        %2367 = vrot.lane.b32.xlu0 %v1899, 64
        %v2368 = vpop.permute.xlu0 %2367
        %2369 = vrot.lane.b32.xlu0 %v1901, 64
        %v2370 = vpop.permute.xlu0 %2369
        %2371 = vrot.lane.b32.xlu0 %v1904, 64
        %v2372 = vpop.permute.xlu0 %2371
        %2373 = vrot.lane.b32.xlu0 %v1906, 64
        %v2374 = vpop.permute.xlu0 %2373
        %2375 = vrot.lane.b32.xlu0 %v1909, 64
        %v2376 = vpop.permute.xlu0 %2375
        %2377 = vrot.lane.b32.xlu0 %v1911, 64
        %v2378 = vpop.permute.xlu0 %2377
        %2379 = vrot.lane.b32.xlu0 %v1914, 64
        %v2380 = vpop.permute.xlu0 %2379
        %2381 = vrot.lane.b32.xlu0 %v1916, 64
        %v2382 = vpop.permute.xlu0 %2381
        %2383 = vrot.lane.b32.xlu0 %v1919, 64
        %v2384 = vpop.permute.xlu0 %2383
        %2385 = vrot.lane.b32.xlu0 %v1921, 64
        %v2386 = vpop.permute.xlu0 %2385
        %2387 = vrot.lane.b32.xlu0 %v1924, 64
        %v2388 = vpop.permute.xlu0 %2387
        %2389 = vrot.lane.b32.xlu0 %v1926, 64
        %v2390 = vpop.permute.xlu0 %2389
        %2391 = vrot.lane.b32.xlu0 %v1929, 64
        %v2392 = vpop.permute.xlu0 %2391
        %2393 = vrot.lane.b32.xlu0 %v1931, 64
        %v2394 = vpop.permute.xlu0 %2393
        %2395 = vrot.lane.b32.xlu0 %v1934, 64
        %v2396 = vpop.permute.xlu0 %2395
        %2397 = vrot.lane.b32.xlu0 %v1936, 64
        %v2398 = vpop.permute.xlu0 %2397
        %2399 = vrot.lane.b32.xlu0 %v1939, 64
        %v2400 = vpop.permute.xlu0 %2399
        %2401 = vrot.lane.b32.xlu0 %v1941, 64
        %v2402 = vpop.permute.xlu0 %2401
        %2403 = vrot.lane.b32.xlu0 %v1944, 64
        %v2404 = vpop.permute.xlu0 %2403
        %2405 = vrot.lane.b32.xlu0 %v1946, 64
        %v2406 = vpop.permute.xlu0 %2405
        %2407 = vrot.lane.b32.xlu0 %v1949, 64
        %v2408 = vpop.permute.xlu0 %2407
        %2409 = vrot.lane.b32.xlu0 %v1951, 64
        %v2410 = vpop.permute.xlu0 %2409
        %2411 = vrot.lane.b32.xlu0 %v1954, 64
        %v2412 = vpop.permute.xlu0 %2411
        %2413 = vrot.lane.b32.xlu0 %v1956, 64
        %v2414 = vpop.permute.xlu0 %2413
        %2415 = vrot.lane.b32.xlu0 %v1959, 64
        %v2416 = vpop.permute.xlu0 %2415
        %2417 = vrot.lane.b32.xlu0 %v1961, 64
        %v2418 = vpop.permute.xlu0 %2417
        %2419 = vrot.lane.b32.xlu0 %v1964, 64
        %v2420 = vpop.permute.xlu0 %2419
        %2421 = vrot.lane.b32.xlu0 %v1966, 64
        %v2422 = vpop.permute.xlu0 %2421
        %2423 = vrot.lane.b32.xlu0 %v1969, 64
        %v2424 = vpop.permute.xlu0 %2423
        %2425 = vrot.lane.b32.xlu0 %v1971, 64
        %v2426 = vpop.permute.xlu0 %2425
        %2427 = vrot.lane.b32.xlu0 %v1974, 64
        %v2428 = vpop.permute.xlu0 %2427
        %2429 = vrot.lane.b32.xlu0 %v1976, 64
        %v2430 = vpop.permute.xlu0 %2429
        %2431 = vrot.lane.b32.xlu0 %v1979, 64
        %v2432 = vpop.permute.xlu0 %2431
        %2433 = vrot.lane.b32.xlu0 %v1981, 64
        %v2434 = vpop.permute.xlu0 %2433
        %2435 = vrot.lane.b32.xlu0 %v1984, 64
        %v2436 = vpop.permute.xlu0 %2435
        %2437 = vrot.lane.b32.xlu0 %v1986, 64
        %v2438 = vpop.permute.xlu0 %2437
        %v2503 = vrot.slane %v2312, 1
        %v2504 = vrot.slane %v2314, 1
        %v2505 = vrot.slane %v2316, 1
        %v2506 = vrot.slane %v2318, 1
        %v2507 = vrot.slane %v2320, 1
        %v2508 = vrot.slane %v2322, 1
        %v2509 = vrot.slane %v2324, 1
        %v2510 = vrot.slane %v2326, 1
        %v2511 = vrot.slane %v2328, 1
        %v2512 = vrot.slane %v2330, 1
        %v2513 = vrot.slane %v2332, 1
        %v2514 = vrot.slane %v2334, 1
        %v2515 = vrot.slane %v2336, 1
        %v2516 = vrot.slane %v2338, 1
        %v2517 = vrot.slane %v2340, 1
        %v2518 = vrot.slane %v2342, 1
        %v2519 = vrot.slane %v2344, 1
        %v2520 = vrot.slane %v2346, 1
        %v2521 = vrot.slane %v2348, 1
        %v2522 = vrot.slane %v2350, 1
        %v2523 = vrot.slane %v2352, 1
        %v2524 = vrot.slane %v2354, 1
        %v2525 = vrot.slane %v2356, 1
        %v2526 = vrot.slane %v2358, 1
        %v2527 = vrot.slane %v2360, 1
        %v2528 = vrot.slane %v2362, 1
        %v2529 = vrot.slane %v2364, 1
        %v2530 = vrot.slane %v2366, 1
        %v2531 = vrot.slane %v2368, 1
        %v2532 = vrot.slane %v2370, 1
        %v2533 = vrot.slane %v2372, 1
        %v2534 = vrot.slane %v2374, 1
        %v2535 = vrot.slane %v2376, 1
        %v2536 = vrot.slane %v2378, 1
        %v2537 = vrot.slane %v2380, 1
        %v2538 = vrot.slane %v2382, 1
        %v2539 = vrot.slane %v2384, 1
        %v2540 = vrot.slane %v2386, 1
        %v2541 = vrot.slane %v2388, 1
        %v2542 = vrot.slane %v2390, 1
        %v2543 = vrot.slane %v2392, 1
        %v2544 = vrot.slane %v2394, 1
        %v2545 = vrot.slane %v2396, 1
        %v2546 = vrot.slane %v2398, 1
        %v2547 = vrot.slane %v2400, 1
        %v2548 = vrot.slane %v2402, 1
        %v2549 = vrot.slane %v2404, 1
        %v2550 = vrot.slane %v2406, 1
        %v2551 = vrot.slane %v2408, 1
        %v2552 = vrot.slane %v2410, 1
        %v2553 = vrot.slane %v2412, 1
        %v2554 = vrot.slane %v2414, 1
        %v2555 = vrot.slane %v2416, 1
        %v2556 = vrot.slane %v2418, 1
        %v2557 = vrot.slane %v2420, 1
        %v2558 = vrot.slane %v2422, 1
        %v2559 = vrot.slane %v2424, 1
        %v2560 = vrot.slane %v2426, 1
        %v2561 = vrot.slane %v2428, 1
        %v2562 = vrot.slane %v2430, 1
        %v2563 = vrot.slane %v2432, 1
        %v2564 = vrot.slane %v2434, 1
        %v2565 = vrot.slane %v2436, 1
        %v2566 = vrot.slane %v2438, 1
        %vm2567 = vcmp.lt.s32.totalorder %v2053, 7
        %v2568 = vsel %vm2567, %v2565, %v2566
        %v2569 = vsel %vm2567, %v2563, %v2564
        %v2570 = vsel %vm2567, %v2561, %v2562
        %v2571 = vsel %vm2567, %v2559, %v2560
        %v2572 = vsel %vm2567, %v2557, %v2558
        %v2573 = vsel %vm2567, %v2555, %v2556
        %v2574 = vsel %vm2567, %v2553, %v2554
        %v2575 = vsel %vm2567, %v2551, %v2552
        %v2576 = vsel %vm2567, %v2549, %v2550
        %v2577 = vsel %vm2567, %v2547, %v2548
        %v2578 = vsel %vm2567, %v2545, %v2546
        %v2579 = vsel %vm2567, %v2543, %v2544
        %v2580 = vsel %vm2567, %v2541, %v2542
        %v2581 = vsel %vm2567, %v2539, %v2540
        %v2582 = vsel %vm2567, %v2537, %v2538
        %v2583 = vsel %vm2567, %v2535, %v2536
        %v2584 = vsel %vm2567, %v2533, %v2534
        %v2585 = vsel %vm2567, %v2531, %v2532
        %v2586 = vsel %vm2567, %v2529, %v2530
        %v2587 = vsel %vm2567, %v2527, %v2528
        %v2588 = vsel %vm2567, %v2525, %v2526
        %v2589 = vsel %vm2567, %v2523, %v2524
        %v2590 = vsel %vm2567, %v2521, %v2522
        %v2591 = vsel %vm2567, %v2519, %v2520
        %v2592 = vsel %vm2567, %v2517, %v2518
        %v2593 = vsel %vm2567, %v2515, %v2516
        %v2594 = vsel %vm2567, %v2513, %v2514
        %v2595 = vsel %vm2567, %v2511, %v2512
        %v2596 = vsel %vm2567, %v2509, %v2510
        %v2597 = vsel %vm2567, %v2507, %v2508
        %v2598 = vsel %vm2567, %v2505, %v2506
        %v2599 = vsel %vm2567, %v2503, %v2504
        %2632 = vrot.lane.b32.xlu0 %v2599, 32
        %v2633 = vpop.permute.xlu0 %2632
        %2634 = vrot.lane.b32.xlu0 %v2598, 32
        %v2635 = vpop.permute.xlu0 %2634
        %2636 = vrot.lane.b32.xlu0 %v2597, 32
        %v2637 = vpop.permute.xlu0 %2636
        %2638 = vrot.lane.b32.xlu0 %v2596, 32
        %v2639 = vpop.permute.xlu0 %2638
        %2640 = vrot.lane.b32.xlu0 %v2595, 32
        %v2641 = vpop.permute.xlu0 %2640
        %2642 = vrot.lane.b32.xlu0 %v2594, 32
        %v2643 = vpop.permute.xlu0 %2642
        %2644 = vrot.lane.b32.xlu0 %v2593, 32
        %v2645 = vpop.permute.xlu0 %2644
        %2646 = vrot.lane.b32.xlu0 %v2592, 32
        %v2647 = vpop.permute.xlu0 %2646
        %2648 = vrot.lane.b32.xlu0 %v2591, 32
        %v2649 = vpop.permute.xlu0 %2648
        %2650 = vrot.lane.b32.xlu0 %v2590, 32
        %v2651 = vpop.permute.xlu0 %2650
        %2652 = vrot.lane.b32.xlu0 %v2589, 32
        %v2653 = vpop.permute.xlu0 %2652
        %2654 = vrot.lane.b32.xlu0 %v2588, 32
        %v2655 = vpop.permute.xlu0 %2654
        %2656 = vrot.lane.b32.xlu0 %v2587, 32
        %v2657 = vpop.permute.xlu0 %2656
        %2658 = vrot.lane.b32.xlu0 %v2586, 32
        %v2659 = vpop.permute.xlu0 %2658
        %2660 = vrot.lane.b32.xlu0 %v2585, 32
        %v2661 = vpop.permute.xlu0 %2660
        %2662 = vrot.lane.b32.xlu0 %v2584, 32
        %v2663 = vpop.permute.xlu0 %2662
        %2664 = vrot.lane.b32.xlu0 %v2583, 32
        %v2665 = vpop.permute.xlu0 %2664
        %2666 = vrot.lane.b32.xlu0 %v2582, 32
        %v2667 = vpop.permute.xlu0 %2666
        %2668 = vrot.lane.b32.xlu0 %v2581, 32
        %v2669 = vpop.permute.xlu0 %2668
        %2670 = vrot.lane.b32.xlu0 %v2580, 32
        %v2671 = vpop.permute.xlu0 %2670
        %2672 = vrot.lane.b32.xlu0 %v2579, 32
        %v2673 = vpop.permute.xlu0 %2672
        %2674 = vrot.lane.b32.xlu0 %v2578, 32
        %v2675 = vpop.permute.xlu0 %2674
        %2676 = vrot.lane.b32.xlu0 %v2577, 32
        %v2677 = vpop.permute.xlu0 %2676
        %2678 = vrot.lane.b32.xlu0 %v2576, 32
        %v2679 = vpop.permute.xlu0 %2678
        %2680 = vrot.lane.b32.xlu0 %v2575, 32
        %v2681 = vpop.permute.xlu0 %2680
        %2682 = vrot.lane.b32.xlu0 %v2574, 32
        %v2683 = vpop.permute.xlu0 %2682
        %2684 = vrot.lane.b32.xlu0 %v2573, 32
        %v2685 = vpop.permute.xlu0 %2684
        %2686 = vrot.lane.b32.xlu0 %v2572, 32
        %v2687 = vpop.permute.xlu0 %2686
        %2688 = vrot.lane.b32.xlu0 %v2571, 32
        %v2689 = vpop.permute.xlu0 %2688
        %2690 = vrot.lane.b32.xlu0 %v2570, 32
        %v2691 = vpop.permute.xlu0 %2690
        %2692 = vrot.lane.b32.xlu0 %v2569, 32
        %v2693 = vpop.permute.xlu0 %2692
        %2694 = vrot.lane.b32.xlu0 %v2568, 32
        %v2695 = vpop.permute.xlu0 %2694
        %v2728 = vadd.f32 %v2215, %v2633
        %v2729 = vadd.f32 %v2216, %v2635
        %v2730 = vadd.f32 %v2217, %v2637
        %v2731 = vadd.f32 %v2218, %v2639
        %v2732 = vadd.f32 %v2219, %v2641
        %v2733 = vadd.f32 %v2220, %v2643
        %v2734 = vadd.f32 %v2221, %v2645
        %v2735 = vadd.f32 %v2222, %v2647
        %v2736 = vadd.f32 %v2223, %v2649
        %v2737 = vadd.f32 %v2224, %v2651
        %v2738 = vadd.f32 %v2225, %v2653
        %v2739 = vadd.f32 %v2226, %v2655
        %v2740 = vadd.f32 %v2227, %v2657
        %v2741 = vadd.f32 %v2228, %v2659
        %v2742 = vadd.f32 %v2229, %v2661
        %v2743 = vadd.f32 %v2230, %v2663
        %v2744 = vadd.f32 %v2231, %v2665
        %v2745 = vadd.f32 %v2232, %v2667
        %v2746 = vadd.f32 %v2233, %v2669
        %v2747 = vadd.f32 %v2234, %v2671
        %v2748 = vadd.f32 %v2235, %v2673
        %v2749 = vadd.f32 %v2236, %v2675
        %v2750 = vadd.f32 %v2237, %v2677
        %v2751 = vadd.f32 %v2238, %v2679
        %v2752 = vadd.f32 %v2239, %v2681
        %v2753 = vadd.f32 %v2240, %v2683
        %v2754 = vadd.f32 %v2241, %v2685
        %v2755 = vadd.f32 %v2242, %v2687
        %v2756 = vadd.f32 %v2243, %v2689
        %v2757 = vadd.f32 %v2244, %v2691
        %v2758 = vadd.f32 %v2245, %v2693
        %v2759 = vadd.f32 %v2246, %v2695
        %v2760 = vld [vmem:[%s4] sm:$0x1]
        %v2762 = vperm.slane %v2760, 0
        %2763 = vrot.lane.b32.xlu0 %v2762, 32
        %v2764 = vpop.permute.xlu0 %2763
        %v2766 = vadd.f32 %v2728, %v2764
        %v2767 = vadd.f32 %v2729, %v2764
        %v2768 = vadd.f32 %v2730, %v2764
        %v2769 = vadd.f32 %v2731, %v2764
        %v2770 = vadd.f32 %v2732, %v2764
        %v2771 = vadd.f32 %v2733, %v2764
        %v2772 = vadd.f32 %v2734, %v2764
        %v2773 = vadd.f32 %v2735, %v2764
        %v2774 = vadd.f32 %v2736, %v2764
        %v2775 = vadd.f32 %v2737, %v2764
        %v2776 = vadd.f32 %v2738, %v2764
        %v2777 = vadd.f32 %v2739, %v2764
        %v2778 = vadd.f32 %v2740, %v2764
        %v2779 = vadd.f32 %v2741, %v2764
        %v2780 = vadd.f32 %v2742, %v2764
        %v2781 = vadd.f32 %v2743, %v2764
        %v2782 = vadd.f32 %v2744, %v2764
        %v2783 = vadd.f32 %v2745, %v2764
        %v2784 = vadd.f32 %v2746, %v2764
        %v2785 = vadd.f32 %v2747, %v2764
        %v2786 = vadd.f32 %v2748, %v2764
        %v2787 = vadd.f32 %v2749, %v2764
        %v2788 = vadd.f32 %v2750, %v2764
        %v2789 = vadd.f32 %v2751, %v2764
        %v2790 = vadd.f32 %v2752, %v2764
        %v2791 = vadd.f32 %v2753, %v2764
        %v2792 = vadd.f32 %v2754, %v2764
        %v2793 = vadd.f32 %v2755, %v2764
        %v2794 = vadd.f32 %v2756, %v2764
        %v2795 = vadd.f32 %v2757, %v2764
        %v2796 = vadd.f32 %v2758, %v2764
        %v2797 = vadd.f32 %v2759, %v2764
        %v2798 = vmax.f32 %v2766, 0.0
        %v2799 = vmax.f32 %v2767, 0.0
        %v2800 = vmax.f32 %v2768, 0.0
        %v2801 = vmax.f32 %v2769, 0.0
        %v2802 = vmax.f32 %v2770, 0.0
        %v2803 = vmax.f32 %v2771, 0.0
        %v2804 = vmax.f32 %v2772, 0.0
        %v2805 = vmax.f32 %v2773, 0.0
        %v2806 = vmax.f32 %v2774, 0.0
        %v2807 = vmax.f32 %v2775, 0.0
        %v2808 = vmax.f32 %v2776, 0.0
        %v2809 = vmax.f32 %v2777, 0.0
        %v2810 = vmax.f32 %v2778, 0.0
        %v2811 = vmax.f32 %v2779, 0.0
        %v2812 = vmax.f32 %v2780, 0.0
        %v2813 = vmax.f32 %v2781, 0.0
        %v2814 = vmax.f32 %v2782, 0.0
        %v2815 = vmax.f32 %v2783, 0.0
        %v2816 = vmax.f32 %v2784, 0.0
        %v2817 = vmax.f32 %v2785, 0.0
        %v2818 = vmax.f32 %v2786, 0.0
        %v2819 = vmax.f32 %v2787, 0.0
        %v2820 = vmax.f32 %v2788, 0.0
        %v2821 = vmax.f32 %v2789, 0.0
        %v2822 = vmax.f32 %v2790, 0.0
        %v2823 = vmax.f32 %v2791, 0.0
        %v2824 = vmax.f32 %v2792, 0.0
        %v2825 = vmax.f32 %v2793, 0.0
        %v2826 = vmax.f32 %v2794, 0.0
        %v2827 = vmax.f32 %v2795, 0.0
        %v2828 = vmax.f32 %v2796, 0.0
        %v2829 = vmax.f32 %v2797, 0.0
        %v2830 = vpack.c.bf16 %v2799, %v2798
        %v2831 = vpack.c.bf16 %v2801, %v2800
        %v2832 = vpack.c.bf16 %v2803, %v2802
        %v2833 = vpack.c.bf16 %v2805, %v2804
        %v2834 = vpack.c.bf16 %v2807, %v2806
        %v2835 = vpack.c.bf16 %v2809, %v2808
        %v2836 = vpack.c.bf16 %v2811, %v2810
        %v2837 = vpack.c.bf16 %v2813, %v2812
        %v2838 = vpack.c.bf16 %v2815, %v2814
        %v2839 = vpack.c.bf16 %v2817, %v2816
        %v2840 = vpack.c.bf16 %v2819, %v2818
        %v2841 = vpack.c.bf16 %v2821, %v2820
        %v2842 = vpack.c.bf16 %v2823, %v2822
        %v2843 = vpack.c.bf16 %v2825, %v2824
        %v2844 = vpack.c.bf16 %v2827, %v2826
        %v2845 = vpack.c.bf16 %v2829, %v2828
        %v2846 = vld [vmem:[%s5] sm:$0xf]
        %v2847 = vld [vmem:[%s5 + $0x4] sm:$0xf]
        %v2848 = vld [vmem:[%s5 + $0x8] sm:$0xf]
        %v2849 = vld [vmem:[%s5 + $0xc] sm:$0xf]
        %v2850 = vld [vmem:[%s6] sm:$0x1]
        %v2852 = vperm.slane %v2850, 0
        %2870 = vrot.lane.b32.xlu0 %v2830, 96
        %v2871 = vpop.permute.xlu0 %2870
        %2872 = vrot.lane.b32.xlu0 %v2831, 96
        %v2873 = vpop.permute.xlu0 %2872
        %2874 = vrot.lane.b32.xlu0 %v2832, 96
        %v2875 = vpop.permute.xlu0 %2874
        %2876 = vrot.lane.b32.xlu0 %v2833, 96
        %v2877 = vpop.permute.xlu0 %2876
        %2878 = vrot.lane.b32.xlu0 %v2834, 96
        %v2879 = vpop.permute.xlu0 %2878
        %2880 = vrot.lane.b32.xlu0 %v2835, 96
        %v2881 = vpop.permute.xlu0 %2880
        %2882 = vrot.lane.b32.xlu0 %v2836, 96
        %v2883 = vpop.permute.xlu0 %2882
        %2884 = vrot.lane.b32.xlu0 %v2837, 96
        %v2885 = vpop.permute.xlu0 %2884
        %2886 = vrot.lane.b32.xlu0 %v2838, 96
        %v2887 = vpop.permute.xlu0 %2886
        %2888 = vrot.lane.b32.xlu0 %v2839, 96
        %v2889 = vpop.permute.xlu0 %2888
        %2890 = vrot.lane.b32.xlu0 %v2840, 96
        %v2891 = vpop.permute.xlu0 %2890
        %2892 = vrot.lane.b32.xlu0 %v2841, 96
        %v2893 = vpop.permute.xlu0 %2892
        %2894 = vrot.lane.b32.xlu0 %v2842, 96
        %v2895 = vpop.permute.xlu0 %2894
        %2896 = vrot.lane.b32.xlu0 %v2843, 96
        %v2897 = vpop.permute.xlu0 %2896
        %2898 = vrot.lane.b32.xlu0 %v2844, 96
        %v2899 = vpop.permute.xlu0 %2898
        %2900 = vrot.lane.b32.xlu0 %v2845, 96
        %v2901 = vpop.permute.xlu0 %2900
        %v2906 = vunpack.c.l.b16 %v2846
        %v2907 = vunpack.c.l.b16 %v2847
        %v2908 = vunpack.c.l.b16 %v2848
        %v2909 = vunpack.c.l.b16 %v2849
        %v2910 = vpack.c.b16 %v2907, %v2906
        %v2911 = vpack.c.b16 %v2909, %v2908
        %v2915 = vsel %vm1544, %v2871, 0
        %v2918 = vsel %vm1544, %v2873, 0
        %v2921 = vsel %vm1544, %v2875, 0
        %v2924 = vsel %vm1544, %v2877, 0
        %v2927 = vsel %vm1544, %v2879, 0
        %v2930 = vsel %vm1544, %v2881, 0
        %v2933 = vsel %vm1544, %v2883, 0
        %v2936 = vsel %vm1544, %v2885, 0
        %v2939 = vsel %vm1544, %v2887, 0
        %v2942 = vsel %vm1544, %v2889, 0
        %v2945 = vsel %vm1544, %v2891, 0
        %v2948 = vsel %vm1544, %v2893, 0
        %v2951 = vsel %vm1544, %v2895, 0
        %v2954 = vsel %vm1544, %v2897, 0
        %v2957 = vsel %vm1544, %v2899, 0
        %v2960 = vsel %vm1544, %v2901, 0
        %2962 = vmatpush.bf16.msra.mxu0 0
        %2963 = vmatpush.bf16.msra.mxu0 0
        %2964 = vmatpush.bf16.msra.mxu0 0
        %2965 = vmatpush.bf16.msra.mxu0 0
        %2966 = vmatpush.bf16.msra.mxu0 0
        %2967 = vmatpush.bf16.msra.mxu0 0
        %2968 = vmatpush.bf16.msra.mxu0 %v2911
        %2969 = vmatpush.bf16.msra.mxu0 %v2910
        %2970 = vmatmul.bf16.gmra.mxu0 %v2915
        %v2971 = vpop.f32.mrf.mxu0
        %v2972 = vadd.f32 %v2852, %v2971
        %v2973 = vpop.f32.mrf.mxu0
        %v2974 = vadd.f32 %v2852, %v2973
        %2975 = vmatmul.bf16.gmra.mxu0 %v2918
        %v2976 = vpop.f32.mrf.mxu0
        %v2977 = vadd.f32 %v2852, %v2976
        %v2978 = vpop.f32.mrf.mxu0
        %v2979 = vadd.f32 %v2852, %v2978
        %2980 = vmatmul.bf16.gmra.mxu0 %v2921
        %v2981 = vpop.f32.mrf.mxu0
        %v2982 = vadd.f32 %v2852, %v2981
        %v2983 = vpop.f32.mrf.mxu0
        %v2984 = vadd.f32 %v2852, %v2983
        %2985 = vmatmul.bf16.gmra.mxu0 %v2924
        %v2986 = vpop.f32.mrf.mxu0
        %v2987 = vadd.f32 %v2852, %v2986
        %v2988 = vpop.f32.mrf.mxu0
        %v2989 = vadd.f32 %v2852, %v2988
        %2990 = vmatmul.bf16.gmra.mxu0 %v2927
        %v2991 = vpop.f32.mrf.mxu0
        %v2992 = vadd.f32 %v2852, %v2991
        %v2993 = vpop.f32.mrf.mxu0
        %v2994 = vadd.f32 %v2852, %v2993
        %2995 = vmatmul.bf16.gmra.mxu0 %v2930
        %v2996 = vpop.f32.mrf.mxu0
        %v2997 = vadd.f32 %v2852, %v2996
        %v2998 = vpop.f32.mrf.mxu0
        %v2999 = vadd.f32 %v2852, %v2998
        %3000 = vmatmul.bf16.gmra.mxu0 %v2933
        %v3001 = vpop.f32.mrf.mxu0
        %v3002 = vadd.f32 %v2852, %v3001
        %v3003 = vpop.f32.mrf.mxu0
        %v3004 = vadd.f32 %v2852, %v3003
        %3005 = vmatmul.bf16.gmra.mxu0 %v2936
        %v3006 = vpop.f32.mrf.mxu0
        %v3007 = vadd.f32 %v2852, %v3006
        %v3008 = vpop.f32.mrf.mxu0
        %v3009 = vadd.f32 %v2852, %v3008
        %3010 = vmatmul.bf16.gmra.mxu0 %v2939
        %v3011 = vpop.f32.mrf.mxu0
        %v3012 = vadd.f32 %v2852, %v3011
        %v3013 = vpop.f32.mrf.mxu0
        %v3014 = vadd.f32 %v2852, %v3013
        %3015 = vmatmul.bf16.gmra.mxu0 %v2942
        %v3016 = vpop.f32.mrf.mxu0
        %v3017 = vadd.f32 %v2852, %v3016
        %v3018 = vpop.f32.mrf.mxu0
        %v3019 = vadd.f32 %v2852, %v3018
        %3020 = vmatmul.bf16.gmra.mxu0 %v2945
        %v3021 = vpop.f32.mrf.mxu0
        %v3022 = vadd.f32 %v2852, %v3021
        %v3023 = vpop.f32.mrf.mxu0
        %v3024 = vadd.f32 %v2852, %v3023
        %3025 = vmatmul.bf16.gmra.mxu0 %v2948
        %v3026 = vpop.f32.mrf.mxu0
        %v3027 = vadd.f32 %v2852, %v3026
        %v3028 = vpop.f32.mrf.mxu0
        %v3029 = vadd.f32 %v2852, %v3028
        %3030 = vmatmul.bf16.gmra.mxu0 %v2951
        %v3031 = vpop.f32.mrf.mxu0
        %v3032 = vadd.f32 %v2852, %v3031
        %v3033 = vpop.f32.mrf.mxu0
        %v3034 = vadd.f32 %v2852, %v3033
        %3035 = vmatmul.bf16.gmra.mxu0 %v2954
        %v3036 = vpop.f32.mrf.mxu0
        %v3037 = vadd.f32 %v2852, %v3036
        %v3038 = vpop.f32.mrf.mxu0
        %v3039 = vadd.f32 %v2852, %v3038
        %3040 = vmatmul.bf16.gmra.mxu0 %v2957
        %v3041 = vpop.f32.mrf.mxu0
        %v3042 = vadd.f32 %v2852, %v3041
        %v3043 = vpop.f32.mrf.mxu0
        %v3044 = vadd.f32 %v2852, %v3043
        %3045 = vmatmul.bf16.gmra.mxu0 %v2960
        %v3046 = vpop.f32.mrf.mxu0
        %v3047 = vadd.f32 %v2852, %v3046
        %v3048 = vpop.f32.mrf.mxu0
        %v3049 = vadd.f32 %v2852, %v3048
        %3050 = vdwg.mxu0
        %v3051 = vld [vmem:[%s268] sm:$0xf]
        %v3052 = vld [vmem:[%s268 + $0x4] sm:$0xf]
        %v3053 = vld [vmem:[%s268 + $0x8] sm:$0xf]
        %v3054 = vld [vmem:[%s268 + $0xc] sm:$0xf]
        %v3055 = vld [vmem:[%s268 + $0x10] sm:$0xf]
        %v3056 = vld [vmem:[%s268 + $0x14] sm:$0xf]
        %v3057 = vld [vmem:[%s268 + $0x18] sm:$0xf]
        %v3058 = vld [vmem:[%s268 + $0x1c] sm:$0xf]
        %v3059 = vld [vmem:[%s268 + $0x20] sm:$0xf]
        %v3060 = vld [vmem:[%s268 + $0x24] sm:$0xf]
        %v3061 = vld [vmem:[%s268 + $0x28] sm:$0xf]
        %v3062 = vld [vmem:[%s268 + $0x2c] sm:$0xf]
        %v3063 = vld [vmem:[%s268 + $0x30] sm:$0xf]
        %v3064 = vld [vmem:[%s268 + $0x34] sm:$0xf]
        %v3065 = vld [vmem:[%s268 + $0x38] sm:$0xf]
        %v3066 = vld [vmem:[%s268 + $0x3c] sm:$0xf]
        %v3067 = vld [vmem:[%s268 + $0x40] sm:$0xf]
        %v3068 = vld [vmem:[%s268 + $0x44] sm:$0xf]
        %v3069 = vld [vmem:[%s268 + $0x48] sm:$0xf]
        %v3070 = vld [vmem:[%s268 + $0x4c] sm:$0xf]
        %v3071 = vld [vmem:[%s268 + $0x50] sm:$0xf]
        %v3072 = vld [vmem:[%s268 + $0x54] sm:$0xf]
        %v3073 = vld [vmem:[%s268 + $0x58] sm:$0xf]
        %v3074 = vld [vmem:[%s268 + $0x5c] sm:$0xf]
        %v3075 = vld [vmem:[%s268 + $0x60] sm:$0xf]
        %v3076 = vld [vmem:[%s268 + $0x64] sm:$0xf]
        %v3077 = vld [vmem:[%s268 + $0x68] sm:$0xf]
        %v3078 = vld [vmem:[%s268 + $0x6c] sm:$0xf]
        %v3079 = vld [vmem:[%s268 + $0x70] sm:$0xf]
        %v3080 = vld [vmem:[%s268 + $0x74] sm:$0xf]
        %v3081 = vld [vmem:[%s268 + $0x78] sm:$0xf]
        %v3082 = vld [vmem:[%s268 + $0x7c] sm:$0xf]
        %v3083 = vunpack.c.l.bf16 %v3051
        %v3084 = vunpack.c.l.bf16 %v3052
        %v3085 = vunpack.c.l.bf16 %v3053
        %v3086 = vunpack.c.l.bf16 %v3054
        %v3087 = vunpack.c.l.bf16 %v3055
        %v3088 = vunpack.c.l.bf16 %v3056
        %v3089 = vunpack.c.l.bf16 %v3057
        %v3090 = vunpack.c.l.bf16 %v3058
        %v3091 = vunpack.c.l.bf16 %v3059
        %v3092 = vunpack.c.l.bf16 %v3060
        %v3093 = vunpack.c.l.bf16 %v3061
        %v3094 = vunpack.c.l.bf16 %v3062
        %v3095 = vunpack.c.l.bf16 %v3063
        %v3096 = vunpack.c.l.bf16 %v3064
        %v3097 = vunpack.c.l.bf16 %v3065
        %v3098 = vunpack.c.l.bf16 %v3066
        %v3099 = vunpack.c.l.bf16 %v3067
        %v3100 = vunpack.c.l.bf16 %v3068
        %v3101 = vunpack.c.l.bf16 %v3069
        %v3102 = vunpack.c.l.bf16 %v3070
        %v3103 = vunpack.c.l.bf16 %v3071
        %v3104 = vunpack.c.l.bf16 %v3072
        %v3105 = vunpack.c.l.bf16 %v3073
        %v3106 = vunpack.c.l.bf16 %v3074
        %v3107 = vunpack.c.l.bf16 %v3075
        %v3108 = vunpack.c.l.bf16 %v3076
        %v3109 = vunpack.c.l.bf16 %v3077
        %v3110 = vunpack.c.l.bf16 %v3078
        %v3111 = vunpack.c.l.bf16 %v3079
        %v3112 = vunpack.c.l.bf16 %v3080
        %v3113 = vunpack.c.l.bf16 %v3081
        %v3114 = vunpack.c.l.bf16 %v3082
        %v3115 = vadd.f32 %v2972, %v3083
        %v3116 = vadd.f32 %v2974, %v3084
        %v3117 = vadd.f32 %v2977, %v3085
        %v3118 = vadd.f32 %v2979, %v3086
        %v3119 = vadd.f32 %v2982, %v3087
        %v3120 = vadd.f32 %v2984, %v3088
        %v3121 = vadd.f32 %v2987, %v3089
        %v3122 = vadd.f32 %v2989, %v3090
        %v3123 = vadd.f32 %v2992, %v3091
        %v3124 = vadd.f32 %v2994, %v3092
        %v3125 = vadd.f32 %v2997, %v3093
        %v3126 = vadd.f32 %v2999, %v3094
        %v3127 = vadd.f32 %v3002, %v3095
        %v3128 = vadd.f32 %v3004, %v3096
        %v3129 = vadd.f32 %v3007, %v3097
        %v3130 = vadd.f32 %v3009, %v3098
        %v3131 = vadd.f32 %v3012, %v3099
        %v3132 = vadd.f32 %v3014, %v3100
        %v3133 = vadd.f32 %v3017, %v3101
        %v3134 = vadd.f32 %v3019, %v3102
        %v3135 = vadd.f32 %v3022, %v3103
        %v3136 = vadd.f32 %v3024, %v3104
        %v3137 = vadd.f32 %v3027, %v3105
        %v3138 = vadd.f32 %v3029, %v3106
        %v3139 = vadd.f32 %v3032, %v3107
        %v3140 = vadd.f32 %v3034, %v3108
        %v3141 = vadd.f32 %v3037, %v3109
        %v3142 = vadd.f32 %v3039, %v3110
        %v3143 = vadd.f32 %v3042, %v3111
        %v3144 = vadd.f32 %v3044, %v3112
        %v3145 = vadd.f32 %v3047, %v3113
        %v3146 = vadd.f32 %v3049, %v3114
        %v3147 = vmax.f32 %v3115, 0.0
        %v3148 = vmax.f32 %v3116, 0.0
        %v3149 = vmax.f32 %v3117, 0.0
        %v3150 = vmax.f32 %v3118, 0.0
        %v3151 = vmax.f32 %v3119, 0.0
        %v3152 = vmax.f32 %v3120, 0.0
        %v3153 = vmax.f32 %v3121, 0.0
        %v3154 = vmax.f32 %v3122, 0.0
        %v3155 = vmax.f32 %v3123, 0.0
        %v3156 = vmax.f32 %v3124, 0.0
        %v3157 = vmax.f32 %v3125, 0.0
        %v3158 = vmax.f32 %v3126, 0.0
        %v3159 = vmax.f32 %v3127, 0.0
        %v3160 = vmax.f32 %v3128, 0.0
        %v3161 = vmax.f32 %v3129, 0.0
        %v3162 = vmax.f32 %v3130, 0.0
        %v3163 = vmax.f32 %v3131, 0.0
        %v3164 = vmax.f32 %v3132, 0.0
        %v3165 = vmax.f32 %v3133, 0.0
        %v3166 = vmax.f32 %v3134, 0.0
        %v3167 = vmax.f32 %v3135, 0.0
        %v3168 = vmax.f32 %v3136, 0.0
        %v3169 = vmax.f32 %v3137, 0.0
        %v3170 = vmax.f32 %v3138, 0.0
        %v3171 = vmax.f32 %v3139, 0.0
        %v3172 = vmax.f32 %v3140, 0.0
        %v3173 = vmax.f32 %v3141, 0.0
        %v3174 = vmax.f32 %v3142, 0.0
        %v3175 = vmax.f32 %v3143, 0.0
        %v3176 = vmax.f32 %v3144, 0.0
        %v3177 = vmax.f32 %v3145, 0.0
        %v3178 = vmax.f32 %v3146, 0.0
        %v3179 = vpack.c.bf16 %v3147, %v3147
        %v3180 = vpack.c.bf16 %v3148, %v3148
        %v3181 = vpack.c.bf16 %v3149, %v3149
        %v3182 = vpack.c.bf16 %v3150, %v3150
        %v3183 = vpack.c.bf16 %v3151, %v3151
        %v3184 = vpack.c.bf16 %v3152, %v3152
        %v3185 = vpack.c.bf16 %v3153, %v3153
        %v3186 = vpack.c.bf16 %v3154, %v3154
        %v3187 = vpack.c.bf16 %v3155, %v3155
        %v3188 = vpack.c.bf16 %v3156, %v3156
        %v3189 = vpack.c.bf16 %v3157, %v3157
        %v3190 = vpack.c.bf16 %v3158, %v3158
        %v3191 = vpack.c.bf16 %v3159, %v3159
        %v3192 = vpack.c.bf16 %v3160, %v3160
        %v3193 = vpack.c.bf16 %v3161, %v3161
        %v3194 = vpack.c.bf16 %v3162, %v3162
        %v3195 = vpack.c.bf16 %v3163, %v3163
        %v3196 = vpack.c.bf16 %v3164, %v3164
        %v3197 = vpack.c.bf16 %v3165, %v3165
        %v3198 = vpack.c.bf16 %v3166, %v3166
        %v3199 = vpack.c.bf16 %v3167, %v3167
        %v3200 = vpack.c.bf16 %v3168, %v3168
        %v3201 = vpack.c.bf16 %v3169, %v3169
        %v3202 = vpack.c.bf16 %v3170, %v3170
        %v3203 = vpack.c.bf16 %v3171, %v3171
        %v3204 = vpack.c.bf16 %v3172, %v3172
        %v3205 = vpack.c.bf16 %v3173, %v3173
        %v3206 = vpack.c.bf16 %v3174, %v3174
        %v3207 = vpack.c.bf16 %v3175, %v3175
        %v3208 = vpack.c.bf16 %v3176, %v3176
        %v3209 = vpack.c.bf16 %v3177, %v3177
        %v3210 = vpack.c.bf16 %v3178, %v3178
        %3211 = vst [vmem:[%s299] sm:$0xf] %v3179
        %3212 = vst [vmem:[%s299 + $0x4] sm:$0xf] %v3180
        %3213 = vst [vmem:[%s299 + $0x8] sm:$0xf] %v3181
        %3214 = vst [vmem:[%s299 + $0xc] sm:$0xf] %v3182
        %3215 = vst [vmem:[%s299 + $0x10] sm:$0xf] %v3183
        %3216 = vst [vmem:[%s299 + $0x14] sm:$0xf] %v3184
        %3217 = vst [vmem:[%s299 + $0x18] sm:$0xf] %v3185
        %3218 = vst [vmem:[%s299 + $0x1c] sm:$0xf] %v3186
        %3219 = vst [vmem:[%s299 + $0x20] sm:$0xf] %v3187
        %3220 = vst [vmem:[%s299 + $0x24] sm:$0xf] %v3188
        %3221 = vst [vmem:[%s299 + $0x28] sm:$0xf] %v3189
        %3222 = vst [vmem:[%s299 + $0x2c] sm:$0xf] %v3190
        %3223 = vst [vmem:[%s299 + $0x30] sm:$0xf] %v3191
        %3224 = vst [vmem:[%s299 + $0x34] sm:$0xf] %v3192
        %3225 = vst [vmem:[%s299 + $0x38] sm:$0xf] %v3193
        %3226 = vst [vmem:[%s299 + $0x3c] sm:$0xf] %v3194
        %3227 = vst [vmem:[%s299 + $0x40] sm:$0xf] %v3195
        %3228 = vst [vmem:[%s299 + $0x44] sm:$0xf] %v3196
        %3229 = vst [vmem:[%s299 + $0x48] sm:$0xf] %v3197
        %3230 = vst [vmem:[%s299 + $0x4c] sm:$0xf] %v3198
        %3231 = vst [vmem:[%s299 + $0x50] sm:$0xf] %v3199
        %3232 = vst [vmem:[%s299 + $0x54] sm:$0xf] %v3200
        %3233 = vst [vmem:[%s299 + $0x58] sm:$0xf] %v3201
        %3234 = vst [vmem:[%s299 + $0x5c] sm:$0xf] %v3202
        %3235 = vst [vmem:[%s299 + $0x60] sm:$0xf] %v3203
        %3236 = vst [vmem:[%s299 + $0x64] sm:$0xf] %v3204
        %3237 = vst [vmem:[%s299 + $0x68] sm:$0xf] %v3205
        %3238 = vst [vmem:[%s299 + $0x6c] sm:$0xf] %v3206
        %3239 = vst [vmem:[%s299 + $0x70] sm:$0xf] %v3207
        %3240 = vst [vmem:[%s299 + $0x74] sm:$0xf] %v3208
        %3241 = vst [vmem:[%s299 + $0x78] sm:$0xf] %v3209
        %3242 = vst [vmem:[%s299 + $0x7c] sm:$0xf] %v3210
        %s3243 = sand.u32 %s184, 1
        %s3244 = scalar_lea.sflag [#allocation5], %s3243
        %s3245 = sand.u32 %s184, 1
        %s3246 = smul.addr %s3245, 128
        %s3247 = scalar_lea.vmem [#allocation6], %s3246
        // Predicated region
        $region53: #{tpu_custom_call.1} parent=47 // pred_check
          %p3248 = pneg %p194
        $region54: #{tpu_custom_call.1} parent=47 // pred_check_branch
          %3250 = sbr.rel (%p3248) target = $region56
        $region55: #{tpu_custom_call.1} parent=47 // pred_region
          %s3251 = smul.u32 4, %s24
          %3253 = vsyncadd %s3244, 0
          %s3254 = smul.addr %s3251, 8
          %s3255 = smul.addr %s3254, 4
          %s3256 = scalar_lea.hbm %s7, %s3255
          %s3257 = sshll.u32 %s3247, 4
          %s3258 = int_to_ptr.vmem [resolvable:$true] %s3257
          %s3259 = sshll.u32 %s3256, 4
          %s3260 = int_to_ptr.hbm [resolvable:$true] %s3259
          %3265 = dma.vmem_to_hbm [thread:$0]  %s3258, 2048, %s3260, %s3244, 64, 64, 4
        $region56: #{tpu_custom_call.1} parent=47 // pred_fallthru
          _
      $region48: #{tpu_custom_call.1} parent=5 // pred_fallthru
        _
      %p3266 = scmp.le.s32.totalorder 2, %s19
      // Predicated region
      $region57: #{tpu_custom_call.1} parent=5 // pred_check
        %p3267 = pneg %p3266
      $region58: #{tpu_custom_call.1} parent=5 // pred_check_branch
        %3269 = sbr.rel (%p3267) target = $region60
      $region59: #{tpu_custom_call.1} parent=5 // pred_region
        %s3270 = ssub.s32 %s19, 2
        // Predicated region
        $region61: #{tpu_custom_call.1} parent=59 // pred_check
          %p3271 = pneg %p200
        $region62: #{tpu_custom_call.1} parent=59 // pred_check_branch
          %3273 = sbr.rel (%p3271) target = $region64
        $region63: #{tpu_custom_call.1} parent=59 // pred_region
          %s3274 = sand.u32 %s185, 1
          %s3275 = scalar_lea.sflag [#allocation5], %s3274
          %s3276 = sand.u32 %s185, 1
          %s3277 = smul.addr %s3276, 128
          %s3278 = scalar_lea.vmem [#allocation6], %s3277
          %3280 = dma.done %s3275, 2048
        $region64: #{tpu_custom_call.1} parent=59 // pred_fallthru
          _
      $region60: #{tpu_custom_call.1} parent=5 // pred_fallthru
        _
    $region6: #{tpu_custom_call.1} parent=1 // loop_footer
      %s23 = sadd.s32 1, %s19
    $region7: #{tpu_custom_call.1} parent=1 // loop_footer_branch
      %18 = sbr.rel target = $region3
    $region8: #{tpu_custom_call.1} parent=1 // loop_exit
      _
    %3281 = vsyncpa [#allocation4], 1
    %s3282 = scalar_lea.sflag [#allocation4], 1
    %3283 = vsyncpa %s3282, 1
    %3284 = vsyncpa [#allocation5], 1
    %s3285 = scalar_lea.sflag [#allocation5], 1
    %3286 = vsyncpa %s3285, 1

</llo_original>
